<compile_context>
chip_gen: v5e
topology: v5e:2x2
jax: 0.10.0
libtpu: 0.0.40
codegen_flags: <defaults>
</compile_context>

<pallas_src>
import math

import jax
import jax.numpy as jnp
from jax.experimental import pallas as pl
from jax.experimental.pallas import tpu as pltpu

# ---------------- config (small synthetic BERT) ----------------
VOCAB = 128
TYPE_VOCAB = 2
MAX_POS = 64
HIDDEN = 32
N_LAYERS = 2
N_HEADS = 4
HEAD_DIM = HIDDEN // N_HEADS
INTERMEDIATE = 64
LN_EPS = 1e-12


# ---------------- in-kernel helpers ----------------
def _layer_norm(x, g, b):
    mu = jnp.mean(x, axis=-1, keepdims=True)
    var = jnp.mean(jnp.square(x - mu), axis=-1, keepdims=True)
    return (x - mu) * jax.lax.rsqrt(var + LN_EPS) * g + b


def _gelu_tanh(x):
    # BERT GELU, tanh approximation (== HF "gelu_new"); deviates from erf-GELU by <1e-3.
    c = math.sqrt(2.0 / math.pi)
    return 0.5 * x * (1.0 + jnp.tanh(c * (x + 0.044715 * x * x * x)))


# ---------------- fused encoder kernel ----------------
# grid = (B, N_LAYERS): batch ('parallel') x layer ('arbitrary').
# One invocation = one transformer layer for one batch element; the hidden state is
# carried across the layer axis in VMEM scratch.
def _encoder_kernel(emb_ref, mask_ref, emb_g_ref, emb_b_ref,
                    wqkv_ref, bqkv_ref, wo_ref, bo_ref,
                    ln1_g_ref, ln1_b_ref,
                    w1_ref, b1_ref, w2_ref, b2_ref,
                    ln2_g_ref, ln2_b_ref,
                    out_ref,
                    h_ref, ctx_ref):
    layer = pl.program_id(1)

    # --- embedding LayerNorm (no residual), once per batch element ---
    @pl.when(layer == 0)
    def _init():
        h_ref[...] = _layer_norm(emb_ref[0], emb_g_ref[...], emb_b_ref[...])

    x = h_ref[...]                                                     # [S, H] f32

    # --- fused QKV projection: bf16 MXU operands, fp32 accumulation ---
    qkv = jnp.dot(x.astype(jnp.bfloat16), wqkv_ref[0],
                  preferred_element_type=jnp.float32) + bqkv_ref[0]    # [S, 3H] f32
    qkv_bf = qkv.astype(jnp.bfloat16)

    # --- multi-head self-attention, fully VMEM-resident ---
    mask = mask_ref[0]                                                 # [1, S] additive
    scale = 1.0 / math.sqrt(HEAD_DIM)
    for hh in range(N_HEADS):
        sl = slice(hh * HEAD_DIM, (hh + 1) * HEAD_DIM)
        qh = qkv_bf[:, sl]                                             # [S, Dh]
        kh = qkv_bf[:, HIDDEN + hh * HEAD_DIM:HIDDEN + (hh + 1) * HEAD_DIM]
        vh = qkv_bf[:, 2 * HIDDEN + hh * HEAD_DIM:2 * HIDDEN + (hh + 1) * HEAD_DIM]
        s = jax.lax.dot_general(qh, kh, (((1,), (1,)), ((), ())),
                                preferred_element_type=jnp.float32) * scale
        s = s + mask                                                   # broadcast over queries
        s = s - jnp.max(s, axis=-1, keepdims=True)
        p = jnp.exp(s)
        p = p * pl.reciprocal(jnp.sum(p, axis=-1, keepdims=True), approx=True)
        ctx_ref[:, sl] = jnp.dot(p.astype(jnp.bfloat16), vh,
                                 preferred_element_type=jnp.float32)

    # --- attention output projection + residual + LN ---
    attn = jnp.dot(ctx_ref[...].astype(jnp.bfloat16), wo_ref[0],
                   preferred_element_type=jnp.float32) + bo_ref[0]
    h1 = _layer_norm(attn + x, ln1_g_ref[0], ln1_b_ref[0])

    # --- GELU FFN + residual + LN ---
    ff = jnp.dot(h1.astype(jnp.bfloat16), w1_ref[0],
                 preferred_element_type=jnp.float32) + b1_ref[0]
    ff = _gelu_tanh(ff)
    ff = jnp.dot(ff.astype(jnp.bfloat16), w2_ref[0],
                 preferred_element_type=jnp.float32) + b2_ref[0]
    h2 = _layer_norm(ff + h1, ln2_g_ref[0], ln2_b_ref[0])

    h_ref[...] = h2                                                    # carry to next layer

    @pl.when(layer == pl.num_programs(1) - 1)
    def _finalize():
        out_ref[0] = h2


# ---------------- parameter stacking (per-layer -> [L, ...]) ----------------
def _stack_layer_params(layers):
    def stack(name, bf16=False):
        a = jnp.stack([lp[name] for lp in layers], axis=0)
        return a.astype(jnp.bfloat16) if bf16 else a

    def stack_row(name):
        return jnp.stack([lp[name].reshape(1, -1) for lp in layers], axis=0)

    wqkv = jnp.stack(
        [jnp.concatenate([lp["wq"], lp["wk"], lp["wv"]], axis=1) for lp in layers],
        axis=0).astype(jnp.bfloat16)                                   # [L, H, 3H]
    bqkv = jnp.stack(
        [jnp.concatenate([lp["bq"], lp["bk"], lp["bv"]]).reshape(1, -1) for lp in layers],
        axis=0)                                                        # [L, 1, 3H]
    return dict(
        wqkv=wqkv, bqkv=bqkv,
        wo=stack("wo", True), bo=stack_row("bo"),
        ln1_g=stack_row("ln1_g"), ln1_b=stack_row("ln1_b"),
        w1=stack("w1", True), b1=stack_row("b1"),
        w2=stack("w2", True), b2=stack_row("b2"),
        ln2_g=stack_row("ln2_g"), ln2_b=stack_row("ln2_b"),
    )


# ---------------- model wrapper ----------------
def dpr_context_encoder(input_ids, attention_mask, params, token_type_ids=None):
    B, S = input_ids.shape
    H, I, L = HIDDEN, INTERMEDIATE, N_LAYERS
    if token_type_ids is None:
        token_type_ids = jnp.zeros_like(input_ids)

    # Embedding lookup is a data-dependent gather -> plain XLA glue; everything after
    # (embedding LN + all encoder layers) runs inside one fused Pallas kernel.
    positions = jnp.arange(S)
    emb = (params["word_emb"][input_ids]
           + params["pos_emb"][positions][None, :, :]
           + params["type_emb"][token_type_ids]).astype(jnp.float32)           # [B, S, H]

    # BERT extended attention mask: additive, broadcast over queries & heads in-kernel.
    mask_add = ((1.0 - attention_mask.astype(jnp.float32)) * -1e9)[:, None, :]  # [B, 1, S]

    sp = _stack_layer_params(params["layers"])

    lw = lambda b, l: (l, 0, 0)     # per-layer weight block
    in_specs = [
        pl.BlockSpec((1, S, H), lambda b, l: (b, 0, 0)),       # emb
        pl.BlockSpec((1, 1, S), lambda b, l: (b, 0, 0)),       # additive mask
        pl.BlockSpec((1, H), lambda b, l: (0, 0)),             # emb LN gamma
        pl.BlockSpec((1, H), lambda b, l: (0, 0)),             # emb LN beta
        pl.BlockSpec((1, H, 3 * H), lw),                       # wqkv (bf16)
        pl.BlockSpec((1, 1, 3 * H), lw),                       # bqkv
        pl.BlockSpec((1, H, H), lw),                           # wo (bf16)
        pl.BlockSpec((1, 1, H), lw),                           # bo
        pl.BlockSpec((1, 1, H), lw),                           # ln1_g
        pl.BlockSpec((1, 1, H), lw),                           # ln1_b
        pl.BlockSpec((1, H, I), lw),                           # w1 (bf16)
        pl.BlockSpec((1, 1, I), lw),                           # b1
        pl.BlockSpec((1, I, H), lw),                           # w2 (bf16)
        pl.BlockSpec((1, 1, H), lw),                           # b2
        pl.BlockSpec((1, 1, H), lw),                           # ln2_g
        pl.BlockSpec((1, 1, H), lw),                           # ln2_b
    ]

    last_hidden = pl.pallas_call(
        _encoder_kernel,
        out_shape=jax.ShapeDtypeStruct((B, S, H), jnp.float32),
        grid_spec=pltpu.PrefetchScalarGridSpec(
            num_scalar_prefetch=0,
            grid=(B, L),
            in_specs=in_specs,
            out_specs=pl.BlockSpec((1, S, H), lambda b, l: (b, 0, 0)),
            scratch_shapes=[
                pltpu.VMEM((S, H), jnp.float32),   # resident hidden state (layer carry)
                pltpu.VMEM((S, H), jnp.float32),   # attention context assembly
            ],
        ),
        compiler_params=pltpu.CompilerParams(
            dimension_semantics=("parallel", "arbitrary")),
    )(emb, mask_add,
      params["emb_ln_g"].reshape(1, H), params["emb_ln_b"].reshape(1, H),
      sp["wqkv"], sp["bqkv"], sp["wo"], sp["bo"], sp["ln1_g"], sp["ln1_b"],
      sp["w1"], sp["b1"], sp["w2"], sp["b2"], sp["ln2_g"], sp["ln2_b"])

    pooler_output = last_hidden[:, 0, :]   # DPR: sequence_output[:, 0, :] (projection_dim == 0)
    return last_hidden, pooler_output


# ---------------- deterministic parameter init ----------------
def init_params(key):
    keys = iter(jax.random.split(key, 64))

    def nrm(shape):
        return 0.02 * jax.random.normal(next(keys), shape, dtype=jnp.float32)

    params = {
        "word_emb": nrm((VOCAB, HIDDEN)),
        "pos_emb": nrm((MAX_POS, HIDDEN)),
        "type_emb": nrm((TYPE_VOCAB, HIDDEN)),
        "emb_ln_g": jnp.ones((HIDDEN,), jnp.float32),
        "emb_ln_b": jnp.zeros((HIDDEN,), jnp.float32),
        "layers": [],
    }
    for _ in range(N_LAYERS):
        params["layers"].append(
            {
                "wq": nrm((HIDDEN, HIDDEN)), "bq": jnp.zeros((HIDDEN,), jnp.float32),
                "wk": nrm((HIDDEN, HIDDEN)), "bk": jnp.zeros((HIDDEN,), jnp.float32),
                "wv": nrm((HIDDEN, HIDDEN)), "bv": jnp.zeros((HIDDEN,), jnp.float32),
                "wo": nrm((HIDDEN, HIDDEN)), "bo": jnp.zeros((HIDDEN,), jnp.float32),
                "ln1_g": jnp.ones((HIDDEN,), jnp.float32),
                "ln1_b": jnp.zeros((HIDDEN,), jnp.float32),
                "w1": nrm((HIDDEN, INTERMEDIATE)),
                "b1": jnp.zeros((INTERMEDIATE,), jnp.float32),
                "w2": nrm((INTERMEDIATE, HIDDEN)),
                "b2": jnp.zeros((HIDDEN,), jnp.float32),
                "ln2_g": jnp.ones((HIDDEN,), jnp.float32),
                "ln2_b": jnp.zeros((HIDDEN,), jnp.float32),
            }
        )
    return params


if __name__ == "__main__":
    # TODO(synk): tokenizer / from_pretrained checkpoint loading has no Pallas equivalent;
    # weights are synthetic and deterministic.
    key = jax.random.PRNGKey(0)
    pkey, ikey = jax.random.split(key)
    params = init_params(pkey)

    B, S = 2, 8
    input_ids = jax.random.randint(ikey, (B, S), 0, VOCAB, dtype=jnp.int32)
    # first 6 tokens real, last 2 padding
    attention_mask = jnp.concatenate(
        [jnp.ones((B, 6), jnp.int32), jnp.zeros((B, 2), jnp.int32)], axis=1
    )

    last_hidden, pooled = dpr_context_encoder(input_ids, attention_mask, params)
    jax.block_until_ready(pooled)
    assert last_hidden.shape == (B, S, HIDDEN)
    assert pooled.shape == (B, HIDDEN)
    assert bool(jnp.all(jnp.isfinite(last_hidden)))
    print("KERNEL_OK")
</pallas_src>

<mosaic_0001>
module attributes {stable_mosaic.version = 11 : i64} {
  func.func @_encoder_kernel(%arg0: i32, %arg1: i32, %arg2: memref<1x8x32xf32, #tpu.memory_space<vmem>>, %arg3: memref<1x1x8xf32, #tpu.memory_space<vmem>>, %arg4: memref<1x32xf32, #tpu.memory_space<vmem>>, %arg5: memref<1x32xf32, #tpu.memory_space<vmem>>, %arg6: memref<1x32x96xbf16, #tpu.memory_space<vmem>>, %arg7: memref<1x1x96xf32, #tpu.memory_space<vmem>>, %arg8: memref<1x32x32xbf16, #tpu.memory_space<vmem>>, %arg9: memref<1x1x32xf32, #tpu.memory_space<vmem>>, %arg10: memref<1x1x32xf32, #tpu.memory_space<vmem>>, %arg11: memref<1x1x32xf32, #tpu.memory_space<vmem>>, %arg12: memref<1x32x64xbf16, #tpu.memory_space<vmem>>, %arg13: memref<1x1x64xf32, #tpu.memory_space<vmem>>, %arg14: memref<1x64x32xbf16, #tpu.memory_space<vmem>>, %arg15: memref<1x1x32xf32, #tpu.memory_space<vmem>>, %arg16: memref<1x1x32xf32, #tpu.memory_space<vmem>>, %arg17: memref<1x1x32xf32, #tpu.memory_space<vmem>>, %arg18: memref<1x8x32xf32, #tpu.memory_space<vmem>>, %arg19: memref<8x32xf32, #tpu.memory_space<vmem>>, %arg20: memref<8x32xf32, #tpu.memory_space<vmem>>) attributes {dimension_semantics = [#tpu.dimension_semantics<parallel>, #tpu.dimension_semantics<arbitrary>], iteration_bounds = array<i64: 2, 2>, scalar_prefetch = 0 : i64, scratch_operands = 2 : i64, tpu.core_type = #tpu.core_type<tc>, window_params = [{transform_indices = @transform_0, window_bounds = array<i64: 1, 8, 32>}, {transform_indices = @transform_1, window_bounds = array<i64: 1, 1, 8>}, {pipeline_mode = #tpu.pipeline_mode<synchronous>, transform_indices = @transform_2, window_bounds = array<i64: 1, 32>}, {pipeline_mode = #tpu.pipeline_mode<synchronous>, transform_indices = @transform_3, window_bounds = array<i64: 1, 32>}, {transform_indices = @transform_4, window_bounds = array<i64: 1, 32, 96>}, {transform_indices = @transform_5, window_bounds = array<i64: 1, 1, 96>}, {transform_indices = @transform_6, window_bounds = array<i64: 1, 32, 32>}, {transform_indices = @transform_7, window_bounds = array<i64: 1, 1, 32>}, {transform_indices = @transform_8, window_bounds = array<i64: 1, 1, 32>}, {transform_indices = @transform_9, window_bounds = array<i64: 1, 1, 32>}, {transform_indices = @transform_10, window_bounds = array<i64: 1, 32, 64>}, {transform_indices = @transform_11, window_bounds = array<i64: 1, 1, 64>}, {transform_indices = @transform_12, window_bounds = array<i64: 1, 64, 32>}, {transform_indices = @transform_13, window_bounds = array<i64: 1, 1, 32>}, {transform_indices = @transform_14, window_bounds = array<i64: 1, 1, 32>}, {transform_indices = @transform_15, window_bounds = array<i64: 1, 1, 32>}, {transform_indices = @transform_16, window_bounds = array<i64: 1, 8, 32>}]} {
    %c0_i32 = arith.constant 0 : i32
    %0 = arith.cmpi eq, %arg1, %c0_i32 : i32
    %1 = arith.extui %0 : i1 to i32
    %c0_i32_0 = arith.constant 0 : i32
    %2 = arith.cmpi ne, %1, %c0_i32_0 : i32
    scf.if %2 {
      %c0_88 = arith.constant 0 : index
      %c0_89 = arith.constant 0 : index
      %c0_90 = arith.constant 0 : index
      %195 = vector.load %arg2[%c0_88, %c0_89, %c0_90] : memref<1x8x32xf32, #tpu.memory_space<vmem>>, vector<1x8x32xf32>
      %196 = vector.shape_cast %195 : vector<1x8x32xf32> to vector<8x32xf32>
      %c0_91 = arith.constant 0 : index
      %c0_92 = arith.constant 0 : index
      %197 = vector.load %arg4[%c0_91, %c0_92] : memref<1x32xf32, #tpu.memory_space<vmem>>, vector<1x32xf32>
      %c0_93 = arith.constant 0 : index
      %c0_94 = arith.constant 0 : index
      %198 = vector.load %arg5[%c0_93, %c0_94] : memref<1x32xf32, #tpu.memory_space<vmem>>, vector<1x32xf32>
      %cst_95 = arith.constant dense<0.000000e+00> : vector<8xf32>
      %199 = vector.multi_reduction <add>, %196, %cst_95 [1] : vector<8x32xf32> to vector<8xf32>
      %200 = vector.shape_cast %199 : vector<8xf32> to vector<8x1xf32>
      %cst_96 = arith.constant 3.200000e+01 : f32
      %201 = vector.broadcast %cst_96 : f32 to vector<8x1xf32>
      %202 = arith.divf %200, %201 : vector<8x1xf32>
      %203 = vector.broadcast %202 : vector<8x1xf32> to vector<8x32xf32>
      %204 = arith.subf %196, %203 : vector<8x32xf32>
      %205 = arith.mulf %204, %204 : vector<8x32xf32>
      %cst_97 = arith.constant dense<0.000000e+00> : vector<8xf32>
      %206 = vector.multi_reduction <add>, %205, %cst_97 [1] : vector<8x32xf32> to vector<8xf32>
      %207 = vector.shape_cast %206 : vector<8xf32> to vector<8x1xf32>
      %cst_98 = arith.constant 3.200000e+01 : f32
      %208 = vector.broadcast %cst_98 : f32 to vector<8x1xf32>
      %209 = arith.divf %207, %208 : vector<8x1xf32>
      %210 = vector.broadcast %202 : vector<8x1xf32> to vector<8x32xf32>
      %211 = arith.subf %196, %210 : vector<8x32xf32>
      %cst_99 = arith.constant 9.99999996E-13 : f32
      %212 = vector.broadcast %cst_99 : f32 to vector<8x1xf32>
      %213 = arith.addf %209, %212 : vector<8x1xf32>
      %214 = math.rsqrt %213 : vector<8x1xf32>
      %215 = vector.broadcast %214 : vector<8x1xf32> to vector<8x32xf32>
      %216 = arith.mulf %211, %215 : vector<8x32xf32>
      %217 = vector.broadcast %197 : vector<1x32xf32> to vector<8x32xf32>
      %218 = arith.mulf %216, %217 : vector<8x32xf32>
      %219 = vector.broadcast %198 : vector<1x32xf32> to vector<8x32xf32>
      %220 = arith.addf %218, %219 : vector<8x32xf32>
      %c0_100 = arith.constant 0 : index
      %c0_101 = arith.constant 0 : index
      %221 = vector.load %arg19[%c0_100, %c0_101] : memref<8x32xf32, #tpu.memory_space<vmem>>, vector<8x32xf32>
      tpu.vector_store %arg19[%c0_100, %c0_101], %220 {strides = array<i32>} : memref<8x32xf32, #tpu.memory_space<vmem>>, vector<8x32xf32>,
    } else {
    }
    %c0 = arith.constant 0 : index
    %c0_1 = arith.constant 0 : index
    %3 = vector.load %arg19[%c0, %c0_1] : memref<8x32xf32, #tpu.memory_space<vmem>>, vector<8x32xf32>
    %4 = arith.truncf %3 : vector<8x32xf32> to vector<8x32xbf16>
    %c0_2 = arith.constant 0 : index
    %c0_3 = arith.constant 0 : index
    %c0_4 = arith.constant 0 : index
    %5 = vector.load %arg6[%c0_2, %c0_3, %c0_4] : memref<1x32x96xbf16, #tpu.memory_space<vmem>>, vector<1x32x96xbf16>
    %6 = vector.shape_cast %5 : vector<1x32x96xbf16> to vector<32x96xbf16>
    %cst = arith.constant dense<0.000000e+00> : vector<8x96xf32>
    %7 = tpu.matmul %4, %6, %cst {dimension_numbers = #tpu.dot_dimension_numbers<[1], [0], [0], [1], [0, 0, 1, 1], [], []>} : vector<8x32xbf16>, vector<32x96xbf16>, vector<8x96xf32> -> vector<8x96xf32>
    %c0_5 = arith.constant 0 : index
    %c0_6 = arith.constant 0 : index
    %c0_7 = arith.constant 0 : index
    %8 = vector.load %arg7[%c0_5, %c0_6, %c0_7] : memref<1x1x96xf32, #tpu.memory_space<vmem>>, vector<1x1x96xf32>
    %9 = vector.shape_cast %8 : vector<1x1x96xf32> to vector<1x96xf32>
    %10 = vector.broadcast %9 : vector<1x96xf32> to vector<8x96xf32>
    %11 = arith.addf %7, %10 : vector<8x96xf32>
    %12 = arith.truncf %11 : vector<8x96xf32> to vector<8x96xbf16>
    %c0_8 = arith.constant 0 : index
    %c0_9 = arith.constant 0 : index
    %c0_10 = arith.constant 0 : index
    %13 = vector.load %arg3[%c0_8, %c0_9, %c0_10] : memref<1x1x8xf32, #tpu.memory_space<vmem>>, vector<1x1x8xf32>
    %14 = vector.shape_cast %13 : vector<1x1x8xf32> to vector<1x8xf32>
    %15 = vector.extract_strided_slice %12 {offsets = [0, 0], sizes = [8, 8], strides = [1, 1]} : vector<8x96xbf16> to vector<8x8xbf16>
    %16 = vector.extract_strided_slice %12 {offsets = [0, 32], sizes = [8, 8], strides = [1, 1]} : vector<8x96xbf16> to vector<8x8xbf16>
    %17 = vector.extract_strided_slice %12 {offsets = [0, 64], sizes = [8, 8], strides = [1, 1]} : vector<8x96xbf16> to vector<8x8xbf16>
    %cst_11 = arith.constant dense<0.000000e+00> : vector<8x8xf32>
    %18 = tpu.matmul %15, %16, %cst_11 {dimension_numbers = #tpu.dot_dimension_numbers<[1], [1], [0], [0], [0, 0, 1, 0], [], []>} : vector<8x8xbf16>, vector<8x8xbf16>, vector<8x8xf32> -> vector<8x8xf32>
    %cst_12 = arith.constant 0.353553385 : f32
    %19 = vector.broadcast %cst_12 : f32 to vector<8x8xf32>
    %20 = arith.mulf %18, %19 : vector<8x8xf32>
    %21 = vector.broadcast %14 : vector<1x8xf32> to vector<8x8xf32>
    %22 = arith.addf %20, %21 : vector<8x8xf32>
    %cst_13 = arith.constant dense<0xFF800000> : vector<8xf32>
    %23 = vector.multi_reduction <maximumf>, %22, %cst_13 [1] : vector<8x8xf32> to vector<8xf32>
    %24 = vector.shape_cast %23 : vector<8xf32> to vector<8x1xf32>
    %25 = vector.broadcast %24 : vector<8x1xf32> to vector<8x8xf32>
    %26 = arith.subf %22, %25 : vector<8x8xf32>
    %27 = math.exp %26 : vector<8x8xf32>
    %cst_14 = arith.constant dense<0.000000e+00> : vector<8xf32>
    %28 = vector.multi_reduction <add>, %27, %cst_14 [1] : vector<8x8xf32> to vector<8xf32>
    %29 = vector.shape_cast %28 : vector<8xf32> to vector<8x1xf32>
    %30 = tpu.reciprocal %29 {approx = true} : vector<8x1xf32> -> vector<8x1xf32>
    %31 = vector.broadcast %30 : vector<8x1xf32> to vector<8x8xf32>
    %32 = arith.mulf %27, %31 : vector<8x8xf32>
    %33 = arith.truncf %32 : vector<8x8xf32> to vector<8x8xbf16>
    %cst_15 = arith.constant dense<0.000000e+00> : vector<8x8xf32>
    %34 = tpu.matmul %33, %17, %cst_15 {dimension_numbers = #tpu.dot_dimension_numbers<[1], [0], [0], [1], [0, 0, 1, 1], [], []>} : vector<8x8xbf16>, vector<8x8xbf16>, vector<8x8xf32> -> vector<8x8xf32>
    %c0_16 = arith.constant 0 : index
    %c0_17 = arith.constant 0 : index
    %35 = vector.load %arg20[%c0_16, %c0_17] : memref<8x32xf32, #tpu.memory_space<vmem>>, vector<8x8xf32>
    tpu.vector_store %arg20[%c0_16, %c0_17], %34 {strides = array<i32>} : memref<8x32xf32, #tpu.memory_space<vmem>>, vector<8x8xf32>,
    %36 = vector.extract_strided_slice %12 {offsets = [0, 8], sizes = [8, 8], strides = [1, 1]} : vector<8x96xbf16> to vector<8x8xbf16>
    %37 = vector.extract_strided_slice %12 {offsets = [0, 40], sizes = [8, 8], strides = [1, 1]} : vector<8x96xbf16> to vector<8x8xbf16>
    %38 = vector.extract_strided_slice %12 {offsets = [0, 72], sizes = [8, 8], strides = [1, 1]} : vector<8x96xbf16> to vector<8x8xbf16>
    %cst_18 = arith.constant dense<0.000000e+00> : vector<8x8xf32>
    %39 = tpu.matmul %36, %37, %cst_18 {dimension_numbers = #tpu.dot_dimension_numbers<[1], [1], [0], [0], [0, 0, 1, 0], [], []>} : vector<8x8xbf16>, vector<8x8xbf16>, vector<8x8xf32> -> vector<8x8xf32>
    %cst_19 = arith.constant 0.353553385 : f32
    %40 = vector.broadcast %cst_19 : f32 to vector<8x8xf32>
    %41 = arith.mulf %39, %40 : vector<8x8xf32>
    %42 = vector.broadcast %14 : vector<1x8xf32> to vector<8x8xf32>
    %43 = arith.addf %41, %42 : vector<8x8xf32>
    %cst_20 = arith.constant dense<0xFF800000> : vector<8xf32>
    %44 = vector.multi_reduction <maximumf>, %43, %cst_20 [1] : vector<8x8xf32> to vector<8xf32>
    %45 = vector.shape_cast %44 : vector<8xf32> to vector<8x1xf32>
    %46 = vector.broadcast %45 : vector<8x1xf32> to vector<8x8xf32>
    %47 = arith.subf %43, %46 : vector<8x8xf32>
    %48 = math.exp %47 : vector<8x8xf32>
    %cst_21 = arith.constant dense<0.000000e+00> : vector<8xf32>
    %49 = vector.multi_reduction <add>, %48, %cst_21 [1] : vector<8x8xf32> to vector<8xf32>
    %50 = vector.shape_cast %49 : vector<8xf32> to vector<8x1xf32>
    %51 = tpu.reciprocal %50 {approx = true} : vector<8x1xf32> -> vector<8x1xf32>
    %52 = vector.broadcast %51 : vector<8x1xf32> to vector<8x8xf32>
    %53 = arith.mulf %48, %52 : vector<8x8xf32>
    %54 = arith.truncf %53 : vector<8x8xf32> to vector<8x8xbf16>
    %cst_22 = arith.constant dense<0.000000e+00> : vector<8x8xf32>
    %55 = tpu.matmul %54, %38, %cst_22 {dimension_numbers = #tpu.dot_dimension_numbers<[1], [0], [0], [1], [0, 0, 1, 1], [], []>} : vector<8x8xbf16>, vector<8x8xbf16>, vector<8x8xf32> -> vector<8x8xf32>
    %c0_23 = arith.constant 0 : index
    %c8 = arith.constant 8 : index
    %56 = vector.load %arg20[%c0_23, %c8] : memref<8x32xf32, #tpu.memory_space<vmem>>, vector<8x8xf32>
    tpu.vector_store %arg20[%c0_23, %c8], %55 {strides = array<i32>} : memref<8x32xf32, #tpu.memory_space<vmem>>, vector<8x8xf32>,
    %57 = vector.extract_strided_slice %12 {offsets = [0, 16], sizes = [8, 8], strides = [1, 1]} : vector<8x96xbf16> to vector<8x8xbf16>
    %58 = vector.extract_strided_slice %12 {offsets = [0, 48], sizes = [8, 8], strides = [1, 1]} : vector<8x96xbf16> to vector<8x8xbf16>
    %59 = vector.extract_strided_slice %12 {offsets = [0, 80], sizes = [8, 8], strides = [1, 1]} : vector<8x96xbf16> to vector<8x8xbf16>
    %cst_24 = arith.constant dense<0.000000e+00> : vector<8x8xf32>
    %60 = tpu.matmul %57, %58, %cst_24 {dimension_numbers = #tpu.dot_dimension_numbers<[1], [1], [0], [0], [0, 0, 1, 0], [], []>} : vector<8x8xbf16>, vector<8x8xbf16>, vector<8x8xf32> -> vector<8x8xf32>
    %cst_25 = arith.constant 0.353553385 : f32
    %61 = vector.broadcast %cst_25 : f32 to vector<8x8xf32>
    %62 = arith.mulf %60, %61 : vector<8x8xf32>
    %63 = vector.broadcast %14 : vector<1x8xf32> to vector<8x8xf32>
    %64 = arith.addf %62, %63 : vector<8x8xf32>
    %cst_26 = arith.constant dense<0xFF800000> : vector<8xf32>
    %65 = vector.multi_reduction <maximumf>, %64, %cst_26 [1] : vector<8x8xf32> to vector<8xf32>
    %66 = vector.shape_cast %65 : vector<8xf32> to vector<8x1xf32>
    %67 = vector.broadcast %66 : vector<8x1xf32> to vector<8x8xf32>
    %68 = arith.subf %64, %67 : vector<8x8xf32>
    %69 = math.exp %68 : vector<8x8xf32>
    %cst_27 = arith.constant dense<0.000000e+00> : vector<8xf32>
    %70 = vector.multi_reduction <add>, %69, %cst_27 [1] : vector<8x8xf32> to vector<8xf32>
    %71 = vector.shape_cast %70 : vector<8xf32> to vector<8x1xf32>
    %72 = tpu.reciprocal %71 {approx = true} : vector<8x1xf32> -> vector<8x1xf32>
    %73 = vector.broadcast %72 : vector<8x1xf32> to vector<8x8xf32>
    %74 = arith.mulf %69, %73 : vector<8x8xf32>
    %75 = arith.truncf %74 : vector<8x8xf32> to vector<8x8xbf16>
    %cst_28 = arith.constant dense<0.000000e+00> : vector<8x8xf32>
    %76 = tpu.matmul %75, %59, %cst_28 {dimension_numbers = #tpu.dot_dimension_numbers<[1], [0], [0], [1], [0, 0, 1, 1], [], []>} : vector<8x8xbf16>, vector<8x8xbf16>, vector<8x8xf32> -> vector<8x8xf32>
    %c0_29 = arith.constant 0 : index
    %c16 = arith.constant 16 : index
    %77 = vector.load %arg20[%c0_29, %c16] : memref<8x32xf32, #tpu.memory_space<vmem>>, vector<8x8xf32>
    tpu.vector_store %arg20[%c0_29, %c16], %76 {strides = array<i32>} : memref<8x32xf32, #tpu.memory_space<vmem>>, vector<8x8xf32>,
    %78 = vector.extract_strided_slice %12 {offsets = [0, 24], sizes = [8, 8], strides = [1, 1]} : vector<8x96xbf16> to vector<8x8xbf16>
    %79 = vector.extract_strided_slice %12 {offsets = [0, 56], sizes = [8, 8], strides = [1, 1]} : vector<8x96xbf16> to vector<8x8xbf16>
    %80 = vector.extract_strided_slice %12 {offsets = [0, 88], sizes = [8, 8], strides = [1, 1]} : vector<8x96xbf16> to vector<8x8xbf16>
    %cst_30 = arith.constant dense<0.000000e+00> : vector<8x8xf32>
    %81 = tpu.matmul %78, %79, %cst_30 {dimension_numbers = #tpu.dot_dimension_numbers<[1], [1], [0], [0], [0, 0, 1, 0], [], []>} : vector<8x8xbf16>, vector<8x8xbf16>, vector<8x8xf32> -> vector<8x8xf32>
    %cst_31 = arith.constant 0.353553385 : f32
    %82 = vector.broadcast %cst_31 : f32 to vector<8x8xf32>
    %83 = arith.mulf %81, %82 : vector<8x8xf32>
    %84 = vector.broadcast %14 : vector<1x8xf32> to vector<8x8xf32>
    %85 = arith.addf %83, %84 : vector<8x8xf32>
    %cst_32 = arith.constant dense<0xFF800000> : vector<8xf32>
    %86 = vector.multi_reduction <maximumf>, %85, %cst_32 [1] : vector<8x8xf32> to vector<8xf32>
    %87 = vector.shape_cast %86 : vector<8xf32> to vector<8x1xf32>
    %88 = vector.broadcast %87 : vector<8x1xf32> to vector<8x8xf32>
    %89 = arith.subf %85, %88 : vector<8x8xf32>
    %90 = math.exp %89 : vector<8x8xf32>
    %cst_33 = arith.constant dense<0.000000e+00> : vector<8xf32>
    %91 = vector.multi_reduction <add>, %90, %cst_33 [1] : vector<8x8xf32> to vector<8xf32>
    %92 = vector.shape_cast %91 : vector<8xf32> to vector<8x1xf32>
    %93 = tpu.reciprocal %92 {approx = true} : vector<8x1xf32> -> vector<8x1xf32>
    %94 = vector.broadcast %93 : vector<8x1xf32> to vector<8x8xf32>
    %95 = arith.mulf %90, %94 : vector<8x8xf32>
    %96 = arith.truncf %95 : vector<8x8xf32> to vector<8x8xbf16>
    %cst_34 = arith.constant dense<0.000000e+00> : vector<8x8xf32>
    %97 = tpu.matmul %96, %80, %cst_34 {dimension_numbers = #tpu.dot_dimension_numbers<[1], [0], [0], [1], [0, 0, 1, 1], [], []>} : vector<8x8xbf16>, vector<8x8xbf16>, vector<8x8xf32> -> vector<8x8xf32>
    %c0_35 = arith.constant 0 : index
    %c24 = arith.constant 24 : index
    %98 = vector.load %arg20[%c0_35, %c24] : memref<8x32xf32, #tpu.memory_space<vmem>>, vector<8x8xf32>
    tpu.vector_store %arg20[%c0_35, %c24], %97 {strides = array<i32>} : memref<8x32xf32, #tpu.memory_space<vmem>>, vector<8x8xf32>,
    %c0_36 = arith.constant 0 : index
    %c0_37 = arith.constant 0 : index
    %99 = vector.load %arg20[%c0_36, %c0_37] : memref<8x32xf32, #tpu.memory_space<vmem>>, vector<8x32xf32>
    %100 = arith.truncf %99 : vector<8x32xf32> to vector<8x32xbf16>
    %c0_38 = arith.constant 0 : index
    %c0_39 = arith.constant 0 : index
    %c0_40 = arith.constant 0 : index
    %101 = vector.load %arg8[%c0_38, %c0_39, %c0_40] : memref<1x32x32xbf16, #tpu.memory_space<vmem>>, vector<1x32x32xbf16>
    %102 = vector.shape_cast %101 : vector<1x32x32xbf16> to vector<32x32xbf16>
    %cst_41 = arith.constant dense<0.000000e+00> : vector<8x32xf32>
    %103 = tpu.matmul %100, %102, %cst_41 {dimension_numbers = #tpu.dot_dimension_numbers<[1], [0], [0], [1], [0, 0, 1, 1], [], []>} : vector<8x32xbf16>, vector<32x32xbf16>, vector<8x32xf32> -> vector<8x32xf32>
    %c0_42 = arith.constant 0 : index
    %c0_43 = arith.constant 0 : index
    %c0_44 = arith.constant 0 : index
    %104 = vector.load %arg9[%c0_42, %c0_43, %c0_44] : memref<1x1x32xf32, #tpu.memory_space<vmem>>, vector<1x1x32xf32>
    %105 = vector.shape_cast %104 : vector<1x1x32xf32> to vector<1x32xf32>
    %106 = vector.broadcast %105 : vector<1x32xf32> to vector<8x32xf32>
    %107 = arith.addf %103, %106 : vector<8x32xf32>
    %108 = arith.addf %107, %3 : vector<8x32xf32>
    %c0_45 = arith.constant 0 : index
    %c0_46 = arith.constant 0 : index
    %c0_47 = arith.constant 0 : index
    %109 = vector.load %arg10[%c0_45, %c0_46, %c0_47] : memref<1x1x32xf32, #tpu.memory_space<vmem>>, vector<1x1x32xf32>
    %110 = vector.shape_cast %109 : vector<1x1x32xf32> to vector<1x32xf32>
    %c0_48 = arith.constant 0 : index
    %c0_49 = arith.constant 0 : index
    %c0_50 = arith.constant 0 : index
    %111 = vector.load %arg11[%c0_48, %c0_49, %c0_50] : memref<1x1x32xf32, #tpu.memory_space<vmem>>, vector<1x1x32xf32>
    %112 = vector.shape_cast %111 : vector<1x1x32xf32> to vector<1x32xf32>
    %cst_51 = arith.constant dense<0.000000e+00> : vector<8xf32>
    %113 = vector.multi_reduction <add>, %108, %cst_51 [1] : vector<8x32xf32> to vector<8xf32>
    %114 = vector.shape_cast %113 : vector<8xf32> to vector<8x1xf32>
    %cst_52 = arith.constant 3.200000e+01 : f32
    %115 = vector.broadcast %cst_52 : f32 to vector<8x1xf32>
    %116 = arith.divf %114, %115 : vector<8x1xf32>
    %117 = vector.broadcast %116 : vector<8x1xf32> to vector<8x32xf32>
    %118 = arith.subf %108, %117 : vector<8x32xf32>
    %119 = arith.mulf %118, %118 : vector<8x32xf32>
    %cst_53 = arith.constant dense<0.000000e+00> : vector<8xf32>
    %120 = vector.multi_reduction <add>, %119, %cst_53 [1] : vector<8x32xf32> to vector<8xf32>
    %121 = vector.shape_cast %120 : vector<8xf32> to vector<8x1xf32>
    %cst_54 = arith.constant 3.200000e+01 : f32
    %122 = vector.broadcast %cst_54 : f32 to vector<8x1xf32>
    %123 = arith.divf %121, %122 : vector<8x1xf32>
    %124 = vector.broadcast %116 : vector<8x1xf32> to vector<8x32xf32>
    %125 = arith.subf %108, %124 : vector<8x32xf32>
    %cst_55 = arith.constant 9.99999996E-13 : f32
    %126 = vector.broadcast %cst_55 : f32 to vector<8x1xf32>
    %127 = arith.addf %123, %126 : vector<8x1xf32>
    %128 = math.rsqrt %127 : vector<8x1xf32>
    %129 = vector.broadcast %128 : vector<8x1xf32> to vector<8x32xf32>
    %130 = arith.mulf %125, %129 : vector<8x32xf32>
    %131 = vector.broadcast %110 : vector<1x32xf32> to vector<8x32xf32>
    %132 = arith.mulf %130, %131 : vector<8x32xf32>
    %133 = vector.broadcast %112 : vector<1x32xf32> to vector<8x32xf32>
    %134 = arith.addf %132, %133 : vector<8x32xf32>
    %135 = arith.truncf %134 : vector<8x32xf32> to vector<8x32xbf16>
    %c0_56 = arith.constant 0 : index
    %c0_57 = arith.constant 0 : index
    %c0_58 = arith.constant 0 : index
    %136 = vector.load %arg12[%c0_56, %c0_57, %c0_58] : memref<1x32x64xbf16, #tpu.memory_space<vmem>>, vector<1x32x64xbf16>
    %137 = vector.shape_cast %136 : vector<1x32x64xbf16> to vector<32x64xbf16>
    %cst_59 = arith.constant dense<0.000000e+00> : vector<8x64xf32>
    %138 = tpu.matmul %135, %137, %cst_59 {dimension_numbers = #tpu.dot_dimension_numbers<[1], [0], [0], [1], [0, 0, 1, 1], [], []>} : vector<8x32xbf16>, vector<32x64xbf16>, vector<8x64xf32> -> vector<8x64xf32>
    %c0_60 = arith.constant 0 : index
    %c0_61 = arith.constant 0 : index
    %c0_62 = arith.constant 0 : index
    %139 = vector.load %arg13[%c0_60, %c0_61, %c0_62] : memref<1x1x64xf32, #tpu.memory_space<vmem>>, vector<1x1x64xf32>
    %140 = vector.shape_cast %139 : vector<1x1x64xf32> to vector<1x64xf32>
    %141 = vector.broadcast %140 : vector<1x64xf32> to vector<8x64xf32>
    %142 = arith.addf %138, %141 : vector<8x64xf32>
    %cst_63 = arith.constant 5.000000e-01 : f32
    %143 = vector.broadcast %cst_63 : f32 to vector<8x64xf32>
    %144 = arith.mulf %143, %142 : vector<8x64xf32>
    %cst_64 = arith.constant 4.471500e-02 : f32
    %145 = vector.broadcast %cst_64 : f32 to vector<8x64xf32>
    %146 = arith.mulf %145, %142 : vector<8x64xf32>
    %147 = arith.mulf %146, %142 : vector<8x64xf32>
    %148 = arith.mulf %147, %142 : vector<8x64xf32>
    %149 = arith.addf %142, %148 : vector<8x64xf32>
    %cst_65 = arith.constant 0.797884583 : f32
    %150 = vector.broadcast %cst_65 : f32 to vector<8x64xf32>
    %151 = arith.mulf %150, %149 : vector<8x64xf32>
    %152 = math.tanh %151 : vector<8x64xf32>
    %cst_66 = arith.constant 1.000000e+00 : f32
    %153 = vector.broadcast %cst_66 : f32 to vector<8x64xf32>
    %154 = arith.addf %153, %152 : vector<8x64xf32>
    %155 = arith.mulf %144, %154 : vector<8x64xf32>
    %156 = arith.truncf %155 : vector<8x64xf32> to vector<8x64xbf16>
    %c0_67 = arith.constant 0 : index
    %c0_68 = arith.constant 0 : index
    %c0_69 = arith.constant 0 : index
    %157 = vector.load %arg14[%c0_67, %c0_68, %c0_69] : memref<1x64x32xbf16, #tpu.memory_space<vmem>>, vector<1x64x32xbf16>
    %158 = vector.shape_cast %157 : vector<1x64x32xbf16> to vector<64x32xbf16>
    %cst_70 = arith.constant dense<0.000000e+00> : vector<8x32xf32>
    %159 = tpu.matmul %156, %158, %cst_70 {dimension_numbers = #tpu.dot_dimension_numbers<[1], [0], [0], [1], [0, 0, 1, 1], [], []>} : vector<8x64xbf16>, vector<64x32xbf16>, vector<8x32xf32> -> vector<8x32xf32>
    %c0_71 = arith.constant 0 : index
    %c0_72 = arith.constant 0 : index
    %c0_73 = arith.constant 0 : index
    %160 = vector.load %arg15[%c0_71, %c0_72, %c0_73] : memref<1x1x32xf32, #tpu.memory_space<vmem>>, vector<1x1x32xf32>
    %161 = vector.shape_cast %160 : vector<1x1x32xf32> to vector<1x32xf32>
    %162 = vector.broadcast %161 : vector<1x32xf32> to vector<8x32xf32>
    %163 = arith.addf %159, %162 : vector<8x32xf32>
    %164 = arith.addf %163, %134 : vector<8x32xf32>
    %c0_74 = arith.constant 0 : index
    %c0_75 = arith.constant 0 : index
    %c0_76 = arith.constant 0 : index
    %165 = vector.load %arg16[%c0_74, %c0_75, %c0_76] : memref<1x1x32xf32, #tpu.memory_space<vmem>>, vector<1x1x32xf32>
    %166 = vector.shape_cast %165 : vector<1x1x32xf32> to vector<1x32xf32>
    %c0_77 = arith.constant 0 : index
    %c0_78 = arith.constant 0 : index
    %c0_79 = arith.constant 0 : index
    %167 = vector.load %arg17[%c0_77, %c0_78, %c0_79] : memref<1x1x32xf32, #tpu.memory_space<vmem>>, vector<1x1x32xf32>
    %168 = vector.shape_cast %167 : vector<1x1x32xf32> to vector<1x32xf32>
    %cst_80 = arith.constant dense<0.000000e+00> : vector<8xf32>
    %169 = vector.multi_reduction <add>, %164, %cst_80 [1] : vector<8x32xf32> to vector<8xf32>
    %170 = vector.shape_cast %169 : vector<8xf32> to vector<8x1xf32>
    %cst_81 = arith.constant 3.200000e+01 : f32
    %171 = vector.broadcast %cst_81 : f32 to vector<8x1xf32>
    %172 = arith.divf %170, %171 : vector<8x1xf32>
    %173 = vector.broadcast %172 : vector<8x1xf32> to vector<8x32xf32>
    %174 = arith.subf %164, %173 : vector<8x32xf32>
    %175 = arith.mulf %174, %174 : vector<8x32xf32>
    %cst_82 = arith.constant dense<0.000000e+00> : vector<8xf32>
    %176 = vector.multi_reduction <add>, %175, %cst_82 [1] : vector<8x32xf32> to vector<8xf32>
    %177 = vector.shape_cast %176 : vector<8xf32> to vector<8x1xf32>
    %cst_83 = arith.constant 3.200000e+01 : f32
    %178 = vector.broadcast %cst_83 : f32 to vector<8x1xf32>
    %179 = arith.divf %177, %178 : vector<8x1xf32>
    %180 = vector.broadcast %172 : vector<8x1xf32> to vector<8x32xf32>
    %181 = arith.subf %164, %180 : vector<8x32xf32>
    %cst_84 = arith.constant 9.99999996E-13 : f32
    %182 = vector.broadcast %cst_84 : f32 to vector<8x1xf32>
    %183 = arith.addf %179, %182 : vector<8x1xf32>
    %184 = math.rsqrt %183 : vector<8x1xf32>
    %185 = vector.broadcast %184 : vector<8x1xf32> to vector<8x32xf32>
    %186 = arith.mulf %181, %185 : vector<8x32xf32>
    %187 = vector.broadcast %166 : vector<1x32xf32> to vector<8x32xf32>
    %188 = arith.mulf %186, %187 : vector<8x32xf32>
    %189 = vector.broadcast %168 : vector<1x32xf32> to vector<8x32xf32>
    %190 = arith.addf %188, %189 : vector<8x32xf32>
    %c0_85 = arith.constant 0 : index
    %c0_86 = arith.constant 0 : index
    %191 = vector.load %arg19[%c0_85, %c0_86] : memref<8x32xf32, #tpu.memory_space<vmem>>, vector<8x32xf32>
    tpu.vector_store %arg19[%c0_85, %c0_86], %190 {strides = array<i32>} : memref<8x32xf32, #tpu.memory_space<vmem>>, vector<8x32xf32>,
    %c1_i32 = arith.constant 1 : i32
    %192 = arith.cmpi eq, %arg1, %c1_i32 : i32
    %193 = arith.extui %192 : i1 to i32
    %c0_i32_87 = arith.constant 0 : i32
    %194 = arith.cmpi ne, %193, %c0_i32_87 : i32
    scf.if %194 {
      %c0_88 = arith.constant 0 : index
      %c0_89 = arith.constant 0 : index
      %c0_90 = arith.constant 0 : index
      %195 = vector.load %arg18[%c0_88, %c0_89, %c0_90] : memref<1x8x32xf32, #tpu.memory_space<vmem>>, vector<1x8x32xf32>
      %196 = vector.shape_cast %195 : vector<1x8x32xf32> to vector<8x32xf32>
      %197 = vector.shape_cast %190 : vector<8x32xf32> to vector<1x8x32xf32>
      tpu.vector_store %arg18[%c0_88, %c0_89, %c0_90], %197 {strides = array<i32>} : memref<1x8x32xf32, #tpu.memory_space<vmem>>, vector<1x8x32xf32>,
    } else {
    }
    return
  }
  func.func @transform_0(%arg0: i32, %arg1: i32) -> (i32, i32, i32) {
    %c0_i32 = arith.constant 0 : i32
    %c0_i32_0 = arith.constant 0 : i32
    %c0_i32_1 = arith.constant 0 : i32
    return %arg0, %c0_i32, %c0_i32_0 : i32, i32, i32
  }
  func.func @transform_1(%arg0: i32, %arg1: i32) -> (i32, i32, i32) {
    %c0_i32 = arith.constant 0 : i32
    %c0_i32_0 = arith.constant 0 : i32
    %c0_i32_1 = arith.constant 0 : i32
    return %arg0, %c0_i32, %c0_i32_0 : i32, i32, i32
  }
  func.func @transform_2(%arg0: i32, %arg1: i32) -> (i32, i32) {
    %c0_i32 = arith.constant 0 : i32
    %c0_i32_0 = arith.constant 0 : i32
    %c0_i32_1 = arith.constant 0 : i32
    return %c0_i32, %c0_i32_0 : i32, i32
  }
  func.func @transform_3(%arg0: i32, %arg1: i32) -> (i32, i32) {
    %c0_i32 = arith.constant 0 : i32
    %c0_i32_0 = arith.constant 0 : i32
    %c0_i32_1 = arith.constant 0 : i32
    return %c0_i32, %c0_i32_0 : i32, i32
  }
  func.func @transform_4(%arg0: i32, %arg1: i32) -> (i32, i32, i32) {
    %c0_i32 = arith.constant 0 : i32
    %c0_i32_0 = arith.constant 0 : i32
    %c0_i32_1 = arith.constant 0 : i32
    return %arg1, %c0_i32, %c0_i32_0 : i32, i32, i32
  }
  func.func @transform_5(%arg0: i32, %arg1: i32) -> (i32, i32, i32) {
    %c0_i32 = arith.constant 0 : i32
    %c0_i32_0 = arith.constant 0 : i32
    %c0_i32_1 = arith.constant 0 : i32
    return %arg1, %c0_i32, %c0_i32_0 : i32, i32, i32
  }
  func.func @transform_6(%arg0: i32, %arg1: i32) -> (i32, i32, i32) {
    %c0_i32 = arith.constant 0 : i32
    %c0_i32_0 = arith.constant 0 : i32
    %c0_i32_1 = arith.constant 0 : i32
    return %arg1, %c0_i32, %c0_i32_0 : i32, i32, i32
  }
  func.func @transform_7(%arg0: i32, %arg1: i32) -> (i32, i32, i32) {
    %c0_i32 = arith.constant 0 : i32
    %c0_i32_0 = arith.constant 0 : i32
    %c0_i32_1 = arith.constant 0 : i32
    return %arg1, %c0_i32, %c0_i32_0 : i32, i32, i32
  }
  func.func @transform_8(%arg0: i32, %arg1: i32) -> (i32, i32, i32) {
    %c0_i32 = arith.constant 0 : i32
    %c0_i32_0 = arith.constant 0 : i32
    %c0_i32_1 = arith.constant 0 : i32
    return %arg1, %c0_i32, %c0_i32_0 : i32, i32, i32
  }
  func.func @transform_9(%arg0: i32, %arg1: i32) -> (i32, i32, i32) {
    %c0_i32 = arith.constant 0 : i32
    %c0_i32_0 = arith.constant 0 : i32
    %c0_i32_1 = arith.constant 0 : i32
    return %arg1, %c0_i32, %c0_i32_0 : i32, i32, i32
  }
  func.func @transform_10(%arg0: i32, %arg1: i32) -> (i32, i32, i32) {
    %c0_i32 = arith.constant 0 : i32
    %c0_i32_0 = arith.constant 0 : i32
    %c0_i32_1 = arith.constant 0 : i32
    return %arg1, %c0_i32, %c0_i32_0 : i32, i32, i32
  }
  func.func @transform_11(%arg0: i32, %arg1: i32) -> (i32, i32, i32) {
    %c0_i32 = arith.constant 0 : i32
    %c0_i32_0 = arith.constant 0 : i32
    %c0_i32_1 = arith.constant 0 : i32
    return %arg1, %c0_i32, %c0_i32_0 : i32, i32, i32
  }
  func.func @transform_12(%arg0: i32, %arg1: i32) -> (i32, i32, i32) {
    %c0_i32 = arith.constant 0 : i32
    %c0_i32_0 = arith.constant 0 : i32
    %c0_i32_1 = arith.constant 0 : i32
    return %arg1, %c0_i32, %c0_i32_0 : i32, i32, i32
  }
  func.func @transform_13(%arg0: i32, %arg1: i32) -> (i32, i32, i32) {
    %c0_i32 = arith.constant 0 : i32
    %c0_i32_0 = arith.constant 0 : i32
    %c0_i32_1 = arith.constant 0 : i32
    return %arg1, %c0_i32, %c0_i32_0 : i32, i32, i32
  }
  func.func @transform_14(%arg0: i32, %arg1: i32) -> (i32, i32, i32) {
    %c0_i32 = arith.constant 0 : i32
    %c0_i32_0 = arith.constant 0 : i32
    %c0_i32_1 = arith.constant 0 : i32
    return %arg1, %c0_i32, %c0_i32_0 : i32, i32, i32
  }
  func.func @transform_15(%arg0: i32, %arg1: i32) -> (i32, i32, i32) {
    %c0_i32 = arith.constant 0 : i32
    %c0_i32_0 = arith.constant 0 : i32
    %c0_i32_1 = arith.constant 0 : i32
    return %arg1, %c0_i32, %c0_i32_0 : i32, i32, i32
  }
  func.func @transform_16(%arg0: i32, %arg1: i32) -> (i32, i32, i32) {
    %c0_i32 = arith.constant 0 : i32
    %c0_i32_0 = arith.constant 0 : i32
    %c0_i32_1 = arith.constant 0 : i32
    return %arg0, %c0_i32, %c0_i32_0 : i32, i32, i32
  }
}

</mosaic_0001>

<llo_original>
// kernel: tpu_custom_call.1
$region0: #{tpu_custom_call.1}
  #allocation0 [shape = 'u32[]', space=smem, size = 0x4, offset = 0x4, fixed_abs, tag = 'smem constant byte address 0x4 - core index']
  #allocation1 [shape = 'u32[72,128]{1,0:T(1,128)}', space=vmem, size = 0x9000, scoped, tag = 'internal scratch']
  #allocation2 [shape = 'f32[8,32]{1,0:T(8,128)}', space=vmem, size = 0x1000, scoped, tag = 'scratch operand']
  #allocation3 [shape = 'f32[8,32]{1,0:T(8,128)}', space=vmem, size = 0x1000, scoped, tag = 'scratch operand']
  %s0 = inlined_call_operand.hbm [shape: f32[2,8,32], index: 0, kind: input, shape index: {}]
  %s1 = inlined_call_operand.hbm [shape: f32[2,1,8], index: 1, kind: input, shape index: {}]
  %s2 = inlined_call_operand.vmem [shape: f32[1,32], index: 2, kind: input, shape index: {}]
  %s3 = inlined_call_operand.hbm [shape: f32[1,32], index: 3, kind: input, shape index: {}]
  %s4 = inlined_call_operand.vmem [shape: bf16[2,32,96], index: 4, kind: input, shape index: {}]
  %s5 = inlined_call_operand.vmem [shape: f32[2,1,96], index: 5, kind: input, shape index: {}]
  %s6 = inlined_call_operand.vmem [shape: bf16[2,32,32], index: 6, kind: input, shape index: {}]
  %s7 = inlined_call_operand.vmem [shape: f32[2,1,32], index: 7, kind: input, shape index: {}]
  %s8 = inlined_call_operand.vmem [shape: f32[2,1,32], index: 8, kind: input, shape index: {}]
  %s9 = inlined_call_operand.hbm [shape: f32[2,1,32], index: 9, kind: input, shape index: {}]
  %s10 = inlined_call_operand.vmem [shape: bf16[2,32,64], index: 10, kind: input, shape index: {}]
  %s11 = inlined_call_operand.vmem [shape: f32[2,1,64], index: 11, kind: input, shape index: {}]
  %s12 = inlined_call_operand.vmem [shape: bf16[2,64,32], index: 12, kind: input, shape index: {}]
  %s13 = inlined_call_operand.vmem [shape: f32[2,1,32], index: 13, kind: input, shape index: {}]
  %s14 = inlined_call_operand.vmem [shape: f32[2,1,32], index: 14, kind: input, shape index: {}]
  %s15 = inlined_call_operand.hbm [shape: f32[2,1,32], index: 15, kind: input, shape index: {}]
  %s16 = inlined_call_operand.hbm [shape: f32[2,8,32], index: 16, kind: output, shape index: {}]
  %s17 = sld [smem:[#allocation0]]
  $region125: #{tpu_custom_call.1} parent=0
    _
  %s19 = ssub.s32 1, %s17
  %s20 = scalar_select 0, %s19, %s17
  $region1: #{tpu_custom_call.1} parent=0
    #allocation4 [shape = 'u8[8192]{0}', space=vmem, size = 0x2000, scoped, tag = 'input window, operand 0']
    #allocation5 [shape = 's32[2]{0}', space=sflag, size = 0x8, scoped, tag = 'scoped memory for tpu_custom_call.1']
    #allocation6 [shape = 's32[2]{0}', space=sflag, size = 0x8, scoped, tag = 'scoped memory for tpu_custom_call.1']
    #allocation7 [shape = 'u8[1024]{0}', space=vmem, size = 0x400, scoped, tag = 'input window, operand 1']
    #allocation8 [shape = 's32[2]{0}', space=sflag, size = 0x8, scoped, tag = 'scoped memory for tpu_custom_call.1']
    #allocation9 [shape = 'u8[512]{0}', space=vmem, size = 0x400, scoped, tag = 'input window, operand 3, single buffered']
    #allocation10 [shape = 'u8[1024]{0}', space=vmem, size = 0x400, scoped, tag = 'input window, operand 9']
    #allocation11 [shape = 's32[2]{0}', space=sflag, size = 0x8, scoped, tag = 'scoped memory for tpu_custom_call.1']
    #allocation12 [shape = 'u8[1024]{0}', space=vmem, size = 0x400, scoped, tag = 'input window, operand 15']
    #allocation13 [shape = 'u8[8192]{0}', space=vmem, size = 0x2000, scoped, tag = 'output window, operand 0']
    %21 = vsyncpa [#allocation5], 0
    %s22 = scalar_lea.sflag [#allocation5], 1
    %23 = vsyncpa %s22, 0
    %24 = vsyncpa [#allocation8], 0
    %s25 = scalar_lea.sflag [#allocation8], 1
    %26 = vsyncpa %s25, 0
    %27 = vsyncpa [#allocation11], 0
    %s28 = scalar_lea.sflag [#allocation11], 1
    %29 = vsyncpa %s28, 0
    %30 = vsyncpa [#allocation6], 0
    %s31 = scalar_lea.sflag [#allocation6], 1
    %32 = vsyncpa %s31, 0
    loop: start=0, step=1, limit=6
    $region2: #{tpu_custom_call.1} parent=1 // loop_pre_header
      _
    $region3: #{tpu_custom_call.1} parent=1 // loop_header
      %s34 = sphi 0, %s38
      %p35 = scmp.ge.s32.totalorder %s34, 6
      %s41 = sphi 0, %s53
      %s42 = sphi 0, %s49
      %s43 = sphi 0, %s41
      %s44 = sphi 0, %s42
      %s45 = sphi 0, %s43
      %s46 = sphi 0, %s44
      %s56 = sphi 0, %s58
      %s59 = sphi 0, %s56
      %s60 = sphi 0, %s59
      %s76 = sphi 0, %s60
      %s82 = sphi 0, %s84
      %s85 = sphi 0, %s82
      %s86 = sphi 0, %s85
      %s102 = sphi 0, %s86
      %s106 = sphi 0, %s106
      %s108 = sphi 0, %s106
      %s109 = sphi 0, %s108
      %s123 = sphi 0, %s109
      %s127 = sphi 0, %s127
      %s129 = sphi 0, %s127
      %s130 = sphi 0, %s129
      %s144 = sphi 0, %s130
      %s150 = sphi 0, %s152
      %s153 = sphi 0, %s150
      %s154 = sphi 0, %s153
      %s170 = sphi 0, %s154
      %s176 = sphi 0, %s178
      %s179 = sphi 0, %s176
      %s180 = sphi 0, %s179
      %s196 = sphi 0, %s180
      %s202 = sphi 0, %s204
      %s205 = sphi 0, %s202
      %s206 = sphi 0, %s205
      %s222 = sphi 0, %s206
      %s228 = sphi 0, %s230
      %s231 = sphi 0, %s228
      %s232 = sphi 0, %s231
      %s248 = sphi 0, %s232
      %s254 = sphi 0, %s256
      %s257 = sphi 0, %s254
      %s258 = sphi 0, %s257
      %s274 = sphi 0, %s258
      %s280 = sphi 0, %s282
      %s283 = sphi 0, %s280
      %s284 = sphi 0, %s283
      %s300 = sphi 0, %s284
      %s306 = sphi 0, %s308
      %s309 = sphi 0, %s306
      %s310 = sphi 0, %s309
      %s326 = sphi 0, %s310
      %s332 = sphi 0, %s334
      %s335 = sphi 0, %s332
      %s336 = sphi 0, %s335
      %s352 = sphi 0, %s336
      %s358 = sphi 0, %s360
      %s361 = sphi 0, %s358
      %s362 = sphi 0, %s361
      %s378 = sphi 0, %s362
      %s384 = sphi 0, %s386
      %s387 = sphi 0, %s384
      %s388 = sphi 0, %s387
      %s404 = sphi 0, %s388
      %s410 = sphi 0, %s412
      %s413 = sphi 0, %s410
      %s414 = sphi 0, %s413
      %s430 = sphi 0, %s414
      %s436 = sphi 0, %s438
      %s439 = sphi 0, %s436
      %s440 = sphi 0, %s439
      %s456 = sphi 0, %s440
      %s462 = sphi 0, %s464
      %s465 = sphi 0, %s462
      %s466 = sphi 0, %s465
      %s482 = sphi 0, %s466
    $region4: #{tpu_custom_call.1} parent=1 // loop_header_branch
      %37 = sbr.rel (%p35) target = $region8
    $region5: #{tpu_custom_call.1} parent=1 // loop_body
      %s39 = ssub.s32 %s34, 1
      %s40 = ssub.s32 %s34, 2
      %s47 = sadd.s32 1, %s42
      %p48 = scmp.ge.s32.totalorder %s47, 2
      %s49 = scalar_select %p48, 0, %s47
      %s50 = sadd.s32 1, %s41
      %s51 = scalar_select %p48, %s50, %s41
      %p52 = scmp.ge.s32.totalorder %s51, 2
      %s53 = scalar_select %p52, 0, %s51
      %s54 = ssub.s32 %s41, %s53
      %p55 = scmp.eq.s32.totalorder %s54, 0
      %s57 = sadd.s32 %s56, 1
      %s58 = scalar_select %p55, %s56, %s57
      %p61 = pneg %p55
      %p62 = scmp.eq.s32.totalorder %s34, 3
      %p63 = por %p61, %p62
      %p64 = scmp.ne.s32.totalorder %s56, %s59
      %p65 = scmp.eq.s32.totalorder %s34, 0
      %p66 = por %p64, %p65
      %p67 = scmp.ne.s32.totalorder %s56, %s59
      %p68 = scmp.eq.s32.totalorder %s39, 3
      %p69 = por %p67, %p68
      %p70 = scmp.ne.s32.totalorder %s59, %s60
      %p71 = scmp.eq.s32.totalorder %s39, 0
      %p72 = por %p70, %p71
      %p73 = scmp.ne.s32.totalorder %s59, %s60
      %p74 = scmp.eq.s32.totalorder %s40, 3
      %p75 = por %p73, %p74
      %p77 = scmp.ne.s32.totalorder %s60, %s76
      %p78 = scmp.eq.s32.totalorder %s40, 0
      %p79 = por %p77, %p78
      %s80 = ssub.s32 %s41, %s53
      %p81 = scmp.eq.s32.totalorder %s80, 0
      %s83 = sadd.s32 %s82, 1
      %s84 = scalar_select %p81, %s82, %s83
      %p87 = pneg %p81
      %p88 = scmp.eq.s32.totalorder %s34, 3
      %p89 = por %p87, %p88
      %p90 = scmp.ne.s32.totalorder %s82, %s85
      %p91 = scmp.eq.s32.totalorder %s34, 0
      %p92 = por %p90, %p91
      %p93 = scmp.ne.s32.totalorder %s82, %s85
      %p94 = scmp.eq.s32.totalorder %s39, 3
      %p95 = por %p93, %p94
      %p96 = scmp.ne.s32.totalorder %s85, %s86
      %p97 = scmp.eq.s32.totalorder %s39, 0
      %p98 = por %p96, %p97
      %p99 = scmp.ne.s32.totalorder %s85, %s86
      %p100 = scmp.eq.s32.totalorder %s40, 3
      %p101 = por %p99, %p100
      %p103 = scmp.ne.s32.totalorder %s86, %s102
      %p104 = scmp.eq.s32.totalorder %s40, 0
      %p105 = por %p103, %p104
      %s107 = sadd.s32 %s106, 1
      %p110 = scmp.eq.s32.totalorder %s34, 3
      %p111 = scmp.ne.s32.totalorder %s106, %s108
      %p112 = scmp.eq.s32.totalorder %s34, 0
      %p113 = por %p111, %p112
      %p114 = scmp.ne.s32.totalorder %s106, %s108
      %p115 = scmp.eq.s32.totalorder %s39, 3
      %p116 = por %p114, %p115
      %p117 = scmp.ne.s32.totalorder %s108, %s109
      %p118 = scmp.eq.s32.totalorder %s39, 0
      %p119 = por %p117, %p118
      %p120 = scmp.ne.s32.totalorder %s108, %s109
      %p121 = scmp.eq.s32.totalorder %s40, 3
      %p122 = por %p120, %p121
      %p124 = scmp.ne.s32.totalorder %s109, %s123
      %p125 = scmp.eq.s32.totalorder %s40, 0
      %p126 = por %p124, %p125
      %s128 = sadd.s32 %s127, 1
      %p131 = scmp.eq.s32.totalorder %s34, 3
      %p132 = scmp.ne.s32.totalorder %s127, %s129
      %p133 = scmp.eq.s32.totalorder %s34, 0
      %p134 = por %p132, %p133
      %p135 = scmp.ne.s32.totalorder %s127, %s129
      %p136 = scmp.eq.s32.totalorder %s39, 3
      %p137 = por %p135, %p136
      %p138 = scmp.ne.s32.totalorder %s129, %s130
      %p139 = scmp.eq.s32.totalorder %s39, 0
      %p140 = por %p138, %p139
      %p141 = scmp.ne.s32.totalorder %s129, %s130
      %p142 = scmp.eq.s32.totalorder %s40, 3
      %p143 = por %p141, %p142
      %p145 = scmp.ne.s32.totalorder %s130, %s144
      %p146 = scmp.eq.s32.totalorder %s40, 0
      %p147 = por %p145, %p146
      %s148 = ssub.s32 %s42, %s49
      %p149 = scmp.eq.s32.totalorder %s148, 0
      %s151 = sadd.s32 %s150, 1
      %s152 = scalar_select %p149, %s150, %s151
      %p155 = pneg %p149
      %p156 = scmp.eq.s32.totalorder %s34, 3
      %p157 = por %p155, %p156
      %p158 = scmp.ne.s32.totalorder %s150, %s153
      %p159 = scmp.eq.s32.totalorder %s34, 0
      %p160 = por %p158, %p159
      %p161 = scmp.ne.s32.totalorder %s150, %s153
      %p162 = scmp.eq.s32.totalorder %s39, 3
      %p163 = por %p161, %p162
      %p164 = scmp.ne.s32.totalorder %s153, %s154
      %p165 = scmp.eq.s32.totalorder %s39, 0
      %p166 = por %p164, %p165
      %p167 = scmp.ne.s32.totalorder %s153, %s154
      %p168 = scmp.eq.s32.totalorder %s40, 3
      %p169 = por %p167, %p168
      %p171 = scmp.ne.s32.totalorder %s154, %s170
      %p172 = scmp.eq.s32.totalorder %s40, 0
      %p173 = por %p171, %p172
      %s174 = ssub.s32 %s42, %s49
      %p175 = scmp.eq.s32.totalorder %s174, 0
      %s177 = sadd.s32 %s176, 1
      %s178 = scalar_select %p175, %s176, %s177
      %p181 = pneg %p175
      %p182 = scmp.eq.s32.totalorder %s34, 3
      %p183 = por %p181, %p182
      %p184 = scmp.ne.s32.totalorder %s176, %s179
      %p185 = scmp.eq.s32.totalorder %s34, 0
      %p186 = por %p184, %p185
      %p187 = scmp.ne.s32.totalorder %s176, %s179
      %p188 = scmp.eq.s32.totalorder %s39, 3
      %p189 = por %p187, %p188
      %p190 = scmp.ne.s32.totalorder %s179, %s180
      %p191 = scmp.eq.s32.totalorder %s39, 0
      %p192 = por %p190, %p191
      %p193 = scmp.ne.s32.totalorder %s179, %s180
      %p194 = scmp.eq.s32.totalorder %s40, 3
      %p195 = por %p193, %p194
      %p197 = scmp.ne.s32.totalorder %s180, %s196
      %p198 = scmp.eq.s32.totalorder %s40, 0
      %p199 = por %p197, %p198
      %s200 = ssub.s32 %s42, %s49
      %p201 = scmp.eq.s32.totalorder %s200, 0
      %s203 = sadd.s32 %s202, 1
      %s204 = scalar_select %p201, %s202, %s203
      %p207 = pneg %p201
      %p208 = scmp.eq.s32.totalorder %s34, 3
      %p209 = por %p207, %p208
      %p210 = scmp.ne.s32.totalorder %s202, %s205
      %p211 = scmp.eq.s32.totalorder %s34, 0
      %p212 = por %p210, %p211
      %p213 = scmp.ne.s32.totalorder %s202, %s205
      %p214 = scmp.eq.s32.totalorder %s39, 3
      %p215 = por %p213, %p214
      %p216 = scmp.ne.s32.totalorder %s205, %s206
      %p217 = scmp.eq.s32.totalorder %s39, 0
      %p218 = por %p216, %p217
      %p219 = scmp.ne.s32.totalorder %s205, %s206
      %p220 = scmp.eq.s32.totalorder %s40, 3
      %p221 = por %p219, %p220
      %p223 = scmp.ne.s32.totalorder %s206, %s222
      %p224 = scmp.eq.s32.totalorder %s40, 0
      %p225 = por %p223, %p224
      %s226 = ssub.s32 %s42, %s49
      %p227 = scmp.eq.s32.totalorder %s226, 0
      %s229 = sadd.s32 %s228, 1
      %s230 = scalar_select %p227, %s228, %s229
      %p233 = pneg %p227
      %p234 = scmp.eq.s32.totalorder %s34, 3
      %p235 = por %p233, %p234
      %p236 = scmp.ne.s32.totalorder %s228, %s231
      %p237 = scmp.eq.s32.totalorder %s34, 0
      %p238 = por %p236, %p237
      %p239 = scmp.ne.s32.totalorder %s228, %s231
      %p240 = scmp.eq.s32.totalorder %s39, 3
      %p241 = por %p239, %p240
      %p242 = scmp.ne.s32.totalorder %s231, %s232
      %p243 = scmp.eq.s32.totalorder %s39, 0
      %p244 = por %p242, %p243
      %p245 = scmp.ne.s32.totalorder %s231, %s232
      %p246 = scmp.eq.s32.totalorder %s40, 3
      %p247 = por %p245, %p246
      %p249 = scmp.ne.s32.totalorder %s232, %s248
      %p250 = scmp.eq.s32.totalorder %s40, 0
      %p251 = por %p249, %p250
      %s252 = ssub.s32 %s42, %s49
      %p253 = scmp.eq.s32.totalorder %s252, 0
      %s255 = sadd.s32 %s254, 1
      %s256 = scalar_select %p253, %s254, %s255
      %p259 = pneg %p253
      %p260 = scmp.eq.s32.totalorder %s34, 3
      %p261 = por %p259, %p260
      %p262 = scmp.ne.s32.totalorder %s254, %s257
      %p263 = scmp.eq.s32.totalorder %s34, 0
      %p264 = por %p262, %p263
      %p265 = scmp.ne.s32.totalorder %s254, %s257
      %p266 = scmp.eq.s32.totalorder %s39, 3
      %p267 = por %p265, %p266
      %p268 = scmp.ne.s32.totalorder %s257, %s258
      %p269 = scmp.eq.s32.totalorder %s39, 0
      %p270 = por %p268, %p269
      %p271 = scmp.ne.s32.totalorder %s257, %s258
      %p272 = scmp.eq.s32.totalorder %s40, 3
      %p273 = por %p271, %p272
      %p275 = scmp.ne.s32.totalorder %s258, %s274
      %p276 = scmp.eq.s32.totalorder %s40, 0
      %p277 = por %p275, %p276
      %s278 = ssub.s32 %s42, %s49
      %p279 = scmp.eq.s32.totalorder %s278, 0
      %s281 = sadd.s32 %s280, 1
      %s282 = scalar_select %p279, %s280, %s281
      %p285 = pneg %p279
      %p286 = scmp.eq.s32.totalorder %s34, 3
      %p287 = por %p285, %p286
      %p288 = scmp.ne.s32.totalorder %s280, %s283
      %p289 = scmp.eq.s32.totalorder %s34, 0
      %p290 = por %p288, %p289
      %p291 = scmp.ne.s32.totalorder %s280, %s283
      %p292 = scmp.eq.s32.totalorder %s39, 3
      %p293 = por %p291, %p292
      %p294 = scmp.ne.s32.totalorder %s283, %s284
      %p295 = scmp.eq.s32.totalorder %s39, 0
      %p296 = por %p294, %p295
      %p297 = scmp.ne.s32.totalorder %s283, %s284
      %p298 = scmp.eq.s32.totalorder %s40, 3
      %p299 = por %p297, %p298
      %p301 = scmp.ne.s32.totalorder %s284, %s300
      %p302 = scmp.eq.s32.totalorder %s40, 0
      %p303 = por %p301, %p302
      %s304 = ssub.s32 %s42, %s49
      %p305 = scmp.eq.s32.totalorder %s304, 0
      %s307 = sadd.s32 %s306, 1
      %s308 = scalar_select %p305, %s306, %s307
      %p311 = pneg %p305
      %p312 = scmp.eq.s32.totalorder %s34, 3
      %p313 = por %p311, %p312
      %p314 = scmp.ne.s32.totalorder %s306, %s309
      %p315 = scmp.eq.s32.totalorder %s34, 0
      %p316 = por %p314, %p315
      %p317 = scmp.ne.s32.totalorder %s306, %s309
      %p318 = scmp.eq.s32.totalorder %s39, 3
      %p319 = por %p317, %p318
      %p320 = scmp.ne.s32.totalorder %s309, %s310
      %p321 = scmp.eq.s32.totalorder %s39, 0
      %p322 = por %p320, %p321
      %p323 = scmp.ne.s32.totalorder %s309, %s310
      %p324 = scmp.eq.s32.totalorder %s40, 3
      %p325 = por %p323, %p324
      %p327 = scmp.ne.s32.totalorder %s310, %s326
      %p328 = scmp.eq.s32.totalorder %s40, 0
      %p329 = por %p327, %p328
      %s330 = ssub.s32 %s42, %s49
      %p331 = scmp.eq.s32.totalorder %s330, 0
      %s333 = sadd.s32 %s332, 1
      %s334 = scalar_select %p331, %s332, %s333
      %p337 = pneg %p331
      %p338 = scmp.eq.s32.totalorder %s34, 3
      %p339 = por %p337, %p338
      %p340 = scmp.ne.s32.totalorder %s332, %s335
      %p341 = scmp.eq.s32.totalorder %s34, 0
      %p342 = por %p340, %p341
      %p343 = scmp.ne.s32.totalorder %s332, %s335
      %p344 = scmp.eq.s32.totalorder %s39, 3
      %p345 = por %p343, %p344
      %p346 = scmp.ne.s32.totalorder %s335, %s336
      %p347 = scmp.eq.s32.totalorder %s39, 0
      %p348 = por %p346, %p347
      %p349 = scmp.ne.s32.totalorder %s335, %s336
      %p350 = scmp.eq.s32.totalorder %s40, 3
      %p351 = por %p349, %p350
      %p353 = scmp.ne.s32.totalorder %s336, %s352
      %p354 = scmp.eq.s32.totalorder %s40, 0
      %p355 = por %p353, %p354
      %s356 = ssub.s32 %s42, %s49
      %p357 = scmp.eq.s32.totalorder %s356, 0
      %s359 = sadd.s32 %s358, 1
      %s360 = scalar_select %p357, %s358, %s359
      %p363 = pneg %p357
      %p364 = scmp.eq.s32.totalorder %s34, 3
      %p365 = por %p363, %p364
      %p366 = scmp.ne.s32.totalorder %s358, %s361
      %p367 = scmp.eq.s32.totalorder %s34, 0
      %p368 = por %p366, %p367
      %p369 = scmp.ne.s32.totalorder %s358, %s361
      %p370 = scmp.eq.s32.totalorder %s39, 3
      %p371 = por %p369, %p370
      %p372 = scmp.ne.s32.totalorder %s361, %s362
      %p373 = scmp.eq.s32.totalorder %s39, 0
      %p374 = por %p372, %p373
      %p375 = scmp.ne.s32.totalorder %s361, %s362
      %p376 = scmp.eq.s32.totalorder %s40, 3
      %p377 = por %p375, %p376
      %p379 = scmp.ne.s32.totalorder %s362, %s378
      %p380 = scmp.eq.s32.totalorder %s40, 0
      %p381 = por %p379, %p380
      %s382 = ssub.s32 %s42, %s49
      %p383 = scmp.eq.s32.totalorder %s382, 0
      %s385 = sadd.s32 %s384, 1
      %s386 = scalar_select %p383, %s384, %s385
      %p389 = pneg %p383
      %p390 = scmp.eq.s32.totalorder %s34, 3
      %p391 = por %p389, %p390
      %p392 = scmp.ne.s32.totalorder %s384, %s387
      %p393 = scmp.eq.s32.totalorder %s34, 0
      %p394 = por %p392, %p393
      %p395 = scmp.ne.s32.totalorder %s384, %s387
      %p396 = scmp.eq.s32.totalorder %s39, 3
      %p397 = por %p395, %p396
      %p398 = scmp.ne.s32.totalorder %s387, %s388
      %p399 = scmp.eq.s32.totalorder %s39, 0
      %p400 = por %p398, %p399
      %p401 = scmp.ne.s32.totalorder %s387, %s388
      %p402 = scmp.eq.s32.totalorder %s40, 3
      %p403 = por %p401, %p402
      %p405 = scmp.ne.s32.totalorder %s388, %s404
      %p406 = scmp.eq.s32.totalorder %s40, 0
      %p407 = por %p405, %p406
      %s408 = ssub.s32 %s42, %s49
      %p409 = scmp.eq.s32.totalorder %s408, 0
      %s411 = sadd.s32 %s410, 1
      %s412 = scalar_select %p409, %s410, %s411
      %p415 = pneg %p409
      %p416 = scmp.eq.s32.totalorder %s34, 3
      %p417 = por %p415, %p416
      %p418 = scmp.ne.s32.totalorder %s410, %s413
      %p419 = scmp.eq.s32.totalorder %s34, 0
      %p420 = por %p418, %p419
      %p421 = scmp.ne.s32.totalorder %s410, %s413
      %p422 = scmp.eq.s32.totalorder %s39, 3
      %p423 = por %p421, %p422
      %p424 = scmp.ne.s32.totalorder %s413, %s414
      %p425 = scmp.eq.s32.totalorder %s39, 0
      %p426 = por %p424, %p425
      %p427 = scmp.ne.s32.totalorder %s413, %s414
      %p428 = scmp.eq.s32.totalorder %s40, 3
      %p429 = por %p427, %p428
      %p431 = scmp.ne.s32.totalorder %s414, %s430
      %p432 = scmp.eq.s32.totalorder %s40, 0
      %p433 = por %p431, %p432
      %s434 = ssub.s32 %s42, %s49
      %p435 = scmp.eq.s32.totalorder %s434, 0
      %s437 = sadd.s32 %s436, 1
      %s438 = scalar_select %p435, %s436, %s437
      %p441 = pneg %p435
      %p442 = scmp.eq.s32.totalorder %s34, 3
      %p443 = por %p441, %p442
      %p444 = scmp.ne.s32.totalorder %s436, %s439
      %p445 = scmp.eq.s32.totalorder %s34, 0
      %p446 = por %p444, %p445
      %p447 = scmp.ne.s32.totalorder %s436, %s439
      %p448 = scmp.eq.s32.totalorder %s39, 3
      %p449 = por %p447, %p448
      %p450 = scmp.ne.s32.totalorder %s439, %s440
      %p451 = scmp.eq.s32.totalorder %s39, 0
      %p452 = por %p450, %p451
      %p453 = scmp.ne.s32.totalorder %s439, %s440
      %p454 = scmp.eq.s32.totalorder %s40, 3
      %p455 = por %p453, %p454
      %p457 = scmp.ne.s32.totalorder %s440, %s456
      %p458 = scmp.eq.s32.totalorder %s40, 0
      %p459 = por %p457, %p458
      %s460 = ssub.s32 %s41, %s53
      %p461 = scmp.eq.s32.totalorder %s460, 0
      %s463 = sadd.s32 %s462, 1
      %s464 = scalar_select %p461, %s462, %s463
      %p467 = pneg %p461
      %p468 = scmp.eq.s32.totalorder %s34, 3
      %p469 = por %p467, %p468
      %p470 = scmp.ne.s32.totalorder %s462, %s465
      %p471 = scmp.eq.s32.totalorder %s34, 0
      %p472 = por %p470, %p471
      %p473 = scmp.ne.s32.totalorder %s462, %s465
      %p474 = scmp.eq.s32.totalorder %s39, 3
      %p475 = por %p473, %p474
      %p476 = scmp.ne.s32.totalorder %s465, %s466
      %p477 = scmp.eq.s32.totalorder %s39, 0
      %p478 = por %p476, %p477
      %p479 = scmp.ne.s32.totalorder %s465, %s466
      %p480 = scmp.eq.s32.totalorder %s40, 3
      %p481 = por %p479, %p480
      %p483 = scmp.ne.s32.totalorder %s466, %s482
      %p484 = scmp.eq.s32.totalorder %s40, 0
      %p485 = por %p483, %p484
      %p486 = scmp.le.s32.totalorder 1, %s34
      %p487 = scmp.lt.s32.totalorder %s34, 5
      %p488 = pnand %p486, %p487
      %p489 = pneg %p488
      // Predicated region
      $region9: #{tpu_custom_call.1} parent=5 // pred_check
        _
      $region10: #{tpu_custom_call.1} parent=5 // pred_check_branch
        %491 = sbr.rel (%p488) target = $region12
      $region11: #{tpu_custom_call.1} parent=5 // pred_region
        %s492 = ssub.s32 %s34, 1
        // Predicated region
        $region13: #{tpu_custom_call.1} parent=11 // pred_check
          %p493 = pneg %p119
        $region14: #{tpu_custom_call.1} parent=11 // pred_check_branch
          %495 = sbr.rel (%p493) target = $region16
        $region15: #{tpu_custom_call.1} parent=11 // pred_region
          _
        $region16: #{tpu_custom_call.1} parent=11 // pred_fallthru
          _
        // Predicated region
        $region17: #{tpu_custom_call.1} parent=11 // pred_check
          %p496 = pneg %p140
        $region18: #{tpu_custom_call.1} parent=11 // pred_check_branch
          %498 = sbr.rel (%p496) target = $region20
        $region19: #{tpu_custom_call.1} parent=11 // pred_region
          %500 = vsyncadd [#allocation8], 0
          %s502 = sshll.u32 %s3, 4
          %s503 = int_to_ptr.hbm [resolvable:$true] %s502
          %s504 = sshll.u32 [#allocation9], 4
          %s505 = int_to_ptr.vmem [resolvable:$true] %s504
          %507 = dma.hbm_to_vmem [thread:$0]  %s503, 16, %s505, [#allocation8]
        $region20: #{tpu_custom_call.1} parent=11 // pred_fallthru
          _
      $region12: #{tpu_custom_call.1} parent=5 // pred_fallthru
        _
      %p508 = scmp.lt.s32.totalorder %s34, 4
      // Predicated region
      $region21: #{tpu_custom_call.1} parent=5 // pred_check
        %p509 = pneg %p508
      $region22: #{tpu_custom_call.1} parent=5 // pred_check_branch
        %511 = sbr.rel (%p509) target = $region24
      $region23: #{tpu_custom_call.1} parent=5 // pred_region
        // Predicated region
        $region25: #{tpu_custom_call.1} parent=23 // pred_check
          %p512 = pneg %p66
        $region26: #{tpu_custom_call.1} parent=23 // pred_check_branch
          %514 = sbr.rel (%p512) target = $region28
        $region27: #{tpu_custom_call.1} parent=23 // pred_region
          %s515 = sand.u32 %s56, 1
          %s516 = scalar_lea.sflag [#allocation5], %s515
          %s517 = sand.u32 %s56, 1
          %s518 = smul.addr %s517, 8
          %s519 = scalar_lea.vmem [#allocation4], %s518
          %521 = vsyncadd %s516, 0
          %s522 = smul.addr %s41, 8
          %s523 = scalar_lea.hbm %s0, %s522
          %s525 = sshll.u32 %s523, 4
          %s526 = int_to_ptr.hbm [resolvable:$true] %s525
          %s527 = sshll.u32 %s519, 4
          %s528 = int_to_ptr.vmem [resolvable:$true] %s527
          %530 = dma.hbm_to_vmem [thread:$0]  %s526, 128, %s528, %s516
        $region28: #{tpu_custom_call.1} parent=23 // pred_fallthru
          _
        // Predicated region
        $region29: #{tpu_custom_call.1} parent=23 // pred_check
          %p531 = pneg %p92
        $region30: #{tpu_custom_call.1} parent=23 // pred_check_branch
          %533 = sbr.rel (%p531) target = $region32
        $region31: #{tpu_custom_call.1} parent=23 // pred_region
          %s534 = sand.u32 %s34, 1
          %s535 = scalar_lea.sflag [#allocation8], %s534
          %s536 = sand.u32 %s82, 1
          %s537 = scalar_lea.vmem [#allocation7], %s536
          %539 = vsyncadd %s535, 0
          %s540 = scalar_lea.hbm %s1, %s41
          %s542 = sshll.u32 %s540, 4
          %s543 = int_to_ptr.hbm [resolvable:$true] %s542
          %s544 = sshll.u32 %s537, 4
          %s545 = int_to_ptr.vmem [resolvable:$true] %s544
          %547 = dma.hbm_to_vmem [thread:$0]  %s543, 16, %s545, %s535
        $region32: #{tpu_custom_call.1} parent=23 // pred_fallthru
          _
        // Predicated region
        $region33: #{tpu_custom_call.1} parent=23 // pred_check
          %p548 = pneg %p160
        $region34: #{tpu_custom_call.1} parent=23 // pred_check_branch
          %550 = sbr.rel (%p548) target = $region36
        $region35: #{tpu_custom_call.1} parent=23 // pred_region
          %p551 = scmp.lt.s32.totalorder %s42, 1
          %s552 = scalar_select %p551, %s42, 1
          %s553 = smul.addr %s552, 4
          %s554 = smul.addr %s553, 4
          %s555 = scalar_lea.vmem %s4, %s554
        $region36: #{tpu_custom_call.1} parent=23 // pred_fallthru
          _
        // Predicated region
        $region37: #{tpu_custom_call.1} parent=23 // pred_check
          %p556 = pneg %p186
        $region38: #{tpu_custom_call.1} parent=23 // pred_check_branch
          %558 = sbr.rel (%p556) target = $region40
        $region39: #{tpu_custom_call.1} parent=23 // pred_region
          %p559 = scmp.lt.s32.totalorder %s42, 1
          %s560 = scalar_select %p559, %s42, 1
          %s561 = scalar_lea.vmem %s5, %s560
        $region40: #{tpu_custom_call.1} parent=23 // pred_fallthru
          _
        // Predicated region
        $region41: #{tpu_custom_call.1} parent=23 // pred_check
          %p562 = pneg %p212
        $region42: #{tpu_custom_call.1} parent=23 // pred_check_branch
          %564 = sbr.rel (%p562) target = $region44
        $region43: #{tpu_custom_call.1} parent=23 // pred_region
          %p565 = scmp.lt.s32.totalorder %s42, 1
          %s566 = scalar_select %p565, %s42, 1
          %s567 = smul.addr %s566, 4
          %s568 = smul.addr %s567, 4
          %s569 = scalar_lea.vmem %s6, %s568
        $region44: #{tpu_custom_call.1} parent=23 // pred_fallthru
          _
        // Predicated region
        $region45: #{tpu_custom_call.1} parent=23 // pred_check
          %p570 = pneg %p238
        $region46: #{tpu_custom_call.1} parent=23 // pred_check_branch
          %572 = sbr.rel (%p570) target = $region48
        $region47: #{tpu_custom_call.1} parent=23 // pred_region
          %p573 = scmp.lt.s32.totalorder %s42, 1
          %s574 = scalar_select %p573, %s42, 1
          %s575 = scalar_lea.vmem %s7, %s574
        $region48: #{tpu_custom_call.1} parent=23 // pred_fallthru
          _
        // Predicated region
        $region49: #{tpu_custom_call.1} parent=23 // pred_check
          %p576 = pneg %p264
        $region50: #{tpu_custom_call.1} parent=23 // pred_check_branch
          %578 = sbr.rel (%p576) target = $region52
        $region51: #{tpu_custom_call.1} parent=23 // pred_region
          %p579 = scmp.lt.s32.totalorder %s42, 1
          %s580 = scalar_select %p579, %s42, 1
          %s581 = scalar_lea.vmem %s8, %s580
        $region52: #{tpu_custom_call.1} parent=23 // pred_fallthru
          _
        // Predicated region
        $region53: #{tpu_custom_call.1} parent=23 // pred_check
          %p582 = pneg %p290
        $region54: #{tpu_custom_call.1} parent=23 // pred_check_branch
          %584 = sbr.rel (%p582) target = $region56
        $region55: #{tpu_custom_call.1} parent=23 // pred_region
          %s585 = sand.u32 %s34, 1
          %s586 = scalar_lea.sflag [#allocation11], %s585
          %s587 = sand.u32 %s280, 1
          %s588 = scalar_lea.vmem [#allocation10], %s587
          %590 = vsyncadd %s586, 0
          %s591 = scalar_lea.hbm %s9, %s42
          %s593 = sshll.u32 %s591, 4
          %s594 = int_to_ptr.hbm [resolvable:$true] %s593
          %s595 = sshll.u32 %s588, 4
          %s596 = int_to_ptr.vmem [resolvable:$true] %s595
          %598 = dma.hbm_to_vmem [thread:$0]  %s594, 16, %s596, %s586
        $region56: #{tpu_custom_call.1} parent=23 // pred_fallthru
          _
        // Predicated region
        $region57: #{tpu_custom_call.1} parent=23 // pred_check
          %p599 = pneg %p316
        $region58: #{tpu_custom_call.1} parent=23 // pred_check_branch
          %601 = sbr.rel (%p599) target = $region60
        $region59: #{tpu_custom_call.1} parent=23 // pred_region
          %p602 = scmp.lt.s32.totalorder %s42, 1
          %s603 = scalar_select %p602, %s42, 1
          %s604 = smul.addr %s603, 4
          %s605 = smul.addr %s604, 4
          %s606 = scalar_lea.vmem %s10, %s605
        $region60: #{tpu_custom_call.1} parent=23 // pred_fallthru
          _
        // Predicated region
        $region61: #{tpu_custom_call.1} parent=23 // pred_check
          %p607 = pneg %p342
        $region62: #{tpu_custom_call.1} parent=23 // pred_check_branch
          %609 = sbr.rel (%p607) target = $region64
        $region63: #{tpu_custom_call.1} parent=23 // pred_region
          %p610 = scmp.lt.s32.totalorder %s42, 1
          %s611 = scalar_select %p610, %s42, 1
          %s612 = scalar_lea.vmem %s11, %s611
        $region64: #{tpu_custom_call.1} parent=23 // pred_fallthru
          _
        // Predicated region
        $region65: #{tpu_custom_call.1} parent=23 // pred_check
          %p613 = pneg %p368
        $region66: #{tpu_custom_call.1} parent=23 // pred_check_branch
          %615 = sbr.rel (%p613) target = $region68
        $region67: #{tpu_custom_call.1} parent=23 // pred_region
          %p616 = scmp.lt.s32.totalorder %s42, 1
          %s617 = scalar_select %p616, %s42, 1
          %s618 = smul.addr %s617, 8
          %s619 = smul.addr %s618, 4
          %s620 = scalar_lea.vmem %s12, %s619
        $region68: #{tpu_custom_call.1} parent=23 // pred_fallthru
          _
        // Predicated region
        $region69: #{tpu_custom_call.1} parent=23 // pred_check
          %p621 = pneg %p394
        $region70: #{tpu_custom_call.1} parent=23 // pred_check_branch
          %623 = sbr.rel (%p621) target = $region72
        $region71: #{tpu_custom_call.1} parent=23 // pred_region
          %p624 = scmp.lt.s32.totalorder %s42, 1
          %s625 = scalar_select %p624, %s42, 1
          %s626 = scalar_lea.vmem %s13, %s625
        $region72: #{tpu_custom_call.1} parent=23 // pred_fallthru
          _
        // Predicated region
        $region73: #{tpu_custom_call.1} parent=23 // pred_check
          %p627 = pneg %p420
        $region74: #{tpu_custom_call.1} parent=23 // pred_check_branch
          %629 = sbr.rel (%p627) target = $region76
        $region75: #{tpu_custom_call.1} parent=23 // pred_region
          %p630 = scmp.lt.s32.totalorder %s42, 1
          %s631 = scalar_select %p630, %s42, 1
          %s632 = scalar_lea.vmem %s14, %s631
        $region76: #{tpu_custom_call.1} parent=23 // pred_fallthru
          _
        // Predicated region
        $region77: #{tpu_custom_call.1} parent=23 // pred_check
          %p633 = pneg %p446
        $region78: #{tpu_custom_call.1} parent=23 // pred_check_branch
          %635 = sbr.rel (%p633) target = $region80
        $region79: #{tpu_custom_call.1} parent=23 // pred_region
          %s636 = sand.u32 %s34, 1
          %s637 = scalar_lea.sflag [#allocation11], %s636
          %s638 = sand.u32 %s436, 1
          %s639 = scalar_lea.vmem [#allocation12], %s638
          %641 = vsyncadd %s637, 0
          %s642 = scalar_lea.hbm %s15, %s42
          %s644 = sshll.u32 %s642, 4
          %s645 = int_to_ptr.hbm [resolvable:$true] %s644
          %s646 = sshll.u32 %s639, 4
          %s647 = int_to_ptr.vmem [resolvable:$true] %s646
          %649 = dma.hbm_to_vmem [thread:$0]  %s645, 16, %s647, %s637
        $region80: #{tpu_custom_call.1} parent=23 // pred_fallthru
          _
      $region24: #{tpu_custom_call.1} parent=5 // pred_fallthru
        _
      %p650 = scmp.le.s32.totalorder 1, %s34
      %p651 = scmp.lt.s32.totalorder %s34, 5
      %p652 = pnand %p650, %p651
      %p653 = pneg %p652
      // Predicated region
      $region81: #{tpu_custom_call.1} parent=5 // pred_check
        _
      $region82: #{tpu_custom_call.1} parent=5 // pred_check_branch
        %655 = sbr.rel (%p652) target = $region84
      $region83: #{tpu_custom_call.1} parent=5 // pred_region
        %s656 = ssub.s32 %s34, 1
        %s657 = sand.u32 %s59, 1
        %s658 = scalar_lea.sflag [#allocation5], %s657
        %s659 = sand.u32 %s59, 1
        %s660 = smul.addr %s659, 8
        %s661 = scalar_lea.vmem [#allocation4], %s660
        // Predicated region
        $region85: #{tpu_custom_call.1} parent=83 // pred_check
          %p662 = pneg %p72
        $region86: #{tpu_custom_call.1} parent=83 // pred_check_branch
          %664 = sbr.rel (%p662) target = $region88
        $region87: #{tpu_custom_call.1} parent=83 // pred_region
          %666 = dma.done %s658, 128
        $region88: #{tpu_custom_call.1} parent=83 // pred_fallthru
          _
        %s667 = sand.u32 %s39, 1
        %s668 = scalar_lea.sflag [#allocation8], %s667
        %s669 = sand.u32 %s85, 1
        %s670 = scalar_lea.vmem [#allocation7], %s669
        // Predicated region
        $region89: #{tpu_custom_call.1} parent=83 // pred_check
          %p671 = pneg %p98
        $region90: #{tpu_custom_call.1} parent=83 // pred_check_branch
          %673 = sbr.rel (%p671) target = $region92
        $region91: #{tpu_custom_call.1} parent=83 // pred_region
          %675 = dma.done %s668, 16
        $region92: #{tpu_custom_call.1} parent=83 // pred_fallthru
          _
        // Predicated region
        $region93: #{tpu_custom_call.1} parent=83 // pred_check
          %p676 = pneg %p140
        $region94: #{tpu_custom_call.1} parent=83 // pred_check_branch
          %678 = sbr.rel (%p676) target = $region96
        $region95: #{tpu_custom_call.1} parent=83 // pred_region
          %680 = dma.done [#allocation8], 16
        $region96: #{tpu_custom_call.1} parent=83 // pred_fallthru
          _
        %s681 = sand.u32 %s39, 1
        %s682 = scalar_lea.sflag [#allocation11], %s681
        %s683 = sand.u32 %s283, 1
        %s684 = scalar_lea.vmem [#allocation10], %s683
        // Predicated region
        $region97: #{tpu_custom_call.1} parent=83 // pred_check
          %p685 = pneg %p296
        $region98: #{tpu_custom_call.1} parent=83 // pred_check_branch
          %687 = sbr.rel (%p685) target = $region100
        $region99: #{tpu_custom_call.1} parent=83 // pred_region
          %689 = dma.done %s682, 16
        $region100: #{tpu_custom_call.1} parent=83 // pred_fallthru
          _
        %s690 = sand.u32 %s39, 1
        %s691 = scalar_lea.sflag [#allocation11], %s690
        %s692 = sand.u32 %s439, 1
        %s693 = scalar_lea.vmem [#allocation12], %s692
        // Predicated region
        $region101: #{tpu_custom_call.1} parent=83 // pred_check
          %p694 = pneg %p452
        $region102: #{tpu_custom_call.1} parent=83 // pred_check_branch
          %696 = sbr.rel (%p694) target = $region104
        $region103: #{tpu_custom_call.1} parent=83 // pred_region
          %698 = dma.done %s691, 16
        $region104: #{tpu_custom_call.1} parent=83 // pred_fallthru
          _
        %s699 = sand.u32 %s59, 1
        %s700 = scalar_lea.sflag [#allocation5], %s699
        %s701 = sand.u32 %s59, 1
        %s702 = smul.addr %s701, 8
        %s703 = scalar_lea.vmem [#allocation4], %s702
        %p704 = pneg %p72
        %p705 = pneg %p69
        %s706 = sand.u32 %s39, 1
        %s707 = scalar_lea.sflag [#allocation8], %s706
        %s708 = sand.u32 %s85, 1
        %s709 = scalar_lea.vmem [#allocation7], %s708
        %p710 = pneg %p98
        %p711 = pneg %p95
        %p712 = pneg %p119
        %p713 = pneg %p116
        %p714 = pneg %p140
        %p715 = pneg %p137
        %p716 = scmp.lt.s32.totalorder %s44, 1
        %s717 = scalar_select %p716, %s44, 1
        %s718 = smul.addr %s717, 4
        %s719 = smul.addr %s718, 4
        %s720 = scalar_lea.vmem %s4, %s719
        %p721 = pneg %p166
        %p722 = pneg %p163
        %p723 = scmp.lt.s32.totalorder %s44, 1
        %s724 = scalar_select %p723, %s44, 1
        %s725 = scalar_lea.vmem %s5, %s724
        %p726 = pneg %p192
        %p727 = pneg %p189
        %p728 = scmp.lt.s32.totalorder %s44, 1
        %s729 = scalar_select %p728, %s44, 1
        %s730 = smul.addr %s729, 4
        %s731 = smul.addr %s730, 4
        %s732 = scalar_lea.vmem %s6, %s731
        %p733 = pneg %p218
        %p734 = pneg %p215
        %p735 = scmp.lt.s32.totalorder %s44, 1
        %s736 = scalar_select %p735, %s44, 1
        %s737 = scalar_lea.vmem %s7, %s736
        %p738 = pneg %p244
        %p739 = pneg %p241
        %p740 = scmp.lt.s32.totalorder %s44, 1
        %s741 = scalar_select %p740, %s44, 1
        %s742 = scalar_lea.vmem %s8, %s741
        %p743 = pneg %p270
        %p744 = pneg %p267
        %s745 = sand.u32 %s39, 1
        %s746 = scalar_lea.sflag [#allocation11], %s745
        %s747 = sand.u32 %s283, 1
        %s748 = scalar_lea.vmem [#allocation10], %s747
        %p749 = pneg %p296
        %p750 = pneg %p293
        %p751 = scmp.lt.s32.totalorder %s44, 1
        %s752 = scalar_select %p751, %s44, 1
        %s753 = smul.addr %s752, 4
        %s754 = smul.addr %s753, 4
        %s755 = scalar_lea.vmem %s10, %s754
        %p756 = pneg %p322
        %p757 = pneg %p319
        %p758 = scmp.lt.s32.totalorder %s44, 1
        %s759 = scalar_select %p758, %s44, 1
        %s760 = scalar_lea.vmem %s11, %s759
        %p761 = pneg %p348
        %p762 = pneg %p345
        %p763 = scmp.lt.s32.totalorder %s44, 1
        %s764 = scalar_select %p763, %s44, 1
        %s765 = smul.addr %s764, 8
        %s766 = smul.addr %s765, 4
        %s767 = scalar_lea.vmem %s12, %s766
        %p768 = pneg %p374
        %p769 = pneg %p371
        %p770 = scmp.lt.s32.totalorder %s44, 1
        %s771 = scalar_select %p770, %s44, 1
        %s772 = scalar_lea.vmem %s13, %s771
        %p773 = pneg %p400
        %p774 = pneg %p397
        %p775 = scmp.lt.s32.totalorder %s44, 1
        %s776 = scalar_select %p775, %s44, 1
        %s777 = scalar_lea.vmem %s14, %s776
        %p778 = pneg %p426
        %p779 = pneg %p423
        %s780 = sand.u32 %s39, 1
        %s781 = scalar_lea.sflag [#allocation11], %s780
        %s782 = sand.u32 %s439, 1
        %s783 = scalar_lea.vmem [#allocation12], %s782
        %p784 = pneg %p452
        %p785 = pneg %p449
        %p786 = pneg %p478
        %p787 = pneg %p475
        %s788 = sand.u32 %s465, 1
        %s789 = scalar_lea.sflag [#allocation6], %s788
        %s790 = sand.u32 %s465, 1
        %s791 = smul.addr %s790, 8
        %s792 = scalar_lea.vmem [#allocation13], %s791
        %p793 = scmp.lt.s32.totalorder %s44, 1
        %s794 = scalar_select %p793, %s44, 1
        %s795 = smul.addr %s794, 4
        %s796 = smul.addr %s795, 4
        %s797 = scalar_lea.vmem %s4, %s796
        %p798 = scmp.lt.s32.totalorder %s44, 1
        %s799 = scalar_select %p798, %s44, 1
        %s800 = scalar_lea.vmem %s5, %s799
        %p801 = scmp.lt.s32.totalorder %s44, 1
        %s802 = scalar_select %p801, %s44, 1
        %s803 = smul.addr %s802, 4
        %s804 = smul.addr %s803, 4
        %s805 = scalar_lea.vmem %s6, %s804
        %p806 = scmp.lt.s32.totalorder %s44, 1
        %s807 = scalar_select %p806, %s44, 1
        %s808 = scalar_lea.vmem %s7, %s807
        %p809 = scmp.lt.s32.totalorder %s44, 1
        %s810 = scalar_select %p809, %s44, 1
        %s811 = scalar_lea.vmem %s8, %s810
        %p812 = scmp.lt.s32.totalorder %s44, 1
        %s813 = scalar_select %p812, %s44, 1
        %s814 = smul.addr %s813, 4
        %s815 = smul.addr %s814, 4
        %s816 = scalar_lea.vmem %s10, %s815
        %p817 = scmp.lt.s32.totalorder %s44, 1
        %s818 = scalar_select %p817, %s44, 1
        %s819 = scalar_lea.vmem %s11, %s818
        %p820 = scmp.lt.s32.totalorder %s44, 1
        %s821 = scalar_select %p820, %s44, 1
        %s822 = smul.addr %s821, 8
        %s823 = smul.addr %s822, 4
        %s824 = scalar_lea.vmem %s12, %s823
        %p825 = scmp.lt.s32.totalorder %s44, 1
        %s826 = scalar_select %p825, %s44, 1
        %s827 = scalar_lea.vmem %s13, %s826
        %p828 = scmp.lt.s32.totalorder %s44, 1
        %s829 = scalar_select %p828, %s44, 1
        %s830 = scalar_lea.vmem %s14, %s829
        %p832 = scmp.eq.s32.totalorder %s44, 0
        // Predicated region
        $region105: #{tpu_custom_call.1} parent=83 // pred_check
          %p833 = pneg %p832
        $region106: #{tpu_custom_call.1} parent=83 // pred_check_branch
          %835 = sbr.rel (%p833) target = $region108
        $region107: #{tpu_custom_call.1} parent=83 // pred_region
          %v836 = vld [vmem:[%s661] sm:$0xff]
          %v837 = vld [vmem:[%s2] sm:$0x1]
          %v838 = vld [vmem:[#allocation9] sm:$0x1]
          %vm839 = vcmask 261120
          %v840 = vsel %vm839, %v836, 0.0
          %841 = vadd.xlane.f32.xlu0 %v840
          %v842 = vpop.xlane.xlu0 %841
          %v843 = vrcp.pop 32.0
          %v844 = vmul.f32 32.0, %v843
          %v845 = vsub.f32 1.0, %v844
          %v846 = vmul.f32 %v843, %v845
          %v847 = vadd.f32 %v843, %v846
          %vm848 = vweird.f32 %v843
          %v849 = vsel %vm848, %v843, %v847
          %v850 = vmul.f32 %v842, %v849
          %v851 = vsub.f32 %v836, %v850
          %v852 = vmul.f32 %v851, %v851
          %v853 = vsel %vm839, %v852, 0.0
          %854 = vadd.xlane.f32.xlu0 %v853
          %v855 = vpop.xlane.xlu0 %854
          %v856 = vmul.f32 %v855, %v849
          %v857 = vadd.f32 %v856, 1e-12
          %v858 = vrsqrt.pop %v857
          %v859 = vmul.f32 %v858, %v857
          %v860 = vmul.f32 %v859, %v858
          %v861 = vmul.f32 0.5, %v860
          %v862 = vsub.f32 1.5, %v861
          %v863 = vmul.f32 %v858, %v862
          %vm864 = vweird.f32 %v857
          %vm865 = vweird.f32 %v858
          %vm866 = vmor %vm864, %vm865
          %v867 = vsel %vm866, %v858, %v863
          %v868 = vmul.f32 %v851, %v867
          %v870 = vperm.slane %v837, 0
          %v872 = vmul.f32 %v868, %v870
          %v874 = vperm.slane %v838, 0
          %v876 = vadd.f32 %v872, %v874
          %877 = vst.msk [vmem:[#allocation2] sm:$0xff] %vm839, %v876
        $region108: #{tpu_custom_call.1} parent=83 // pred_fallthru
          _
        %v878 = vld [vmem:[#allocation2] sm:$0xff]
        %v879 = vpack.c.bf16 %v878, %v878
        %v880 = vld [vmem:[%s797] sm:$0xf]
        %v881 = vld [vmem:[%s797 + $0x4] sm:$0xf]
        %v882 = vld [vmem:[%s797 + $0x8] sm:$0xf]
        %v883 = vld [vmem:[%s797 + $0xc] sm:$0xf]
        %v884 = vld [vmem:[%s800] sm:$0x1]
        %v886 = vperm.slane %v884, 0
        %v892 = vunpack.c.l.b16 %v880
        %v893 = vunpack.c.l.b16 %v881
        %v894 = vunpack.c.l.b16 %v882
        %v895 = vunpack.c.l.b16 %v883
        %v896 = vpack.c.b16 %v893, %v892
        %v897 = vpack.c.b16 %v895, %v894
        %vm900 = vcmask 261120
        %v902 = vsel %vm900, %v879, 0
        %904 = vmatpush.bf16.msra.mxu0 0
        %905 = vmatpush.bf16.msra.mxu0 0
        %906 = vmatpush.bf16.msra.mxu0 0
        %907 = vmatpush.bf16.msra.mxu0 0
        %908 = vmatpush.bf16.msra.mxu0 0
        %909 = vmatpush.bf16.msra.mxu0 0
        %910 = vmatpush.bf16.msra.mxu0 %v897
        %911 = vmatpush.bf16.msra.mxu0 %v896
        %912 = vmatmul.bf16.gmra.mxu0 %v902
        %v913 = vpop.f32.mrf.mxu0
        %v914 = vadd.f32 %v886, %v913
        %v915 = vpop.f32.mrf.mxu0
        %916 = vdwg.mxu0
        %v917 = vpack.c.bf16 %v914, %v914
        %v918 = vld [vmem:[%s670] sm:$0x1]
        %v920 = vunpack.c.l.b16 %v917
        %v921 = vpack.c.b16 %v920, %v920
        %922 = vrot.lane.b32.xlu0 %v921, 96
        %v923 = vpop.permute.xlu0 %922
        %vm924 = vcmask 64512
        %v926 = vsel %vm924, %v917, 0
        %v929 = vsel %vm924, %v923, 0
        %931 = vmatpush.bf16.xpose.msra.mxu0 0
        %932 = vmatpush.bf16.xpose.msra.mxu0 0
        %933 = vmatpush.bf16.xpose.msra.mxu0 0
        %934 = vmatpush.bf16.xpose.msra.mxu0 0
        %935 = vmatpush.bf16.xpose.msra.mxu0 0
        %936 = vmatpush.bf16.xpose.msra.mxu0 0
        %937 = vmatpush.bf16.xpose.msra.mxu0 0
        %938 = vmatpush.bf16.xpose.msra.mxu0 %v929
        %939 = vmatmul.bf16.gmra.mxu0 %v926
        %v940 = vpop.f32.mrf.mxu0
        %v941 = vadd.f32 0.0, %v940
        %v942 = vpop.f32.mrf.mxu0
        %943 = vdwg.mxu0
        %v944 = vmul.f32 %v941, 0.35355338
        %v946 = vperm.slane %v918, 0
        %v948 = vadd.f32 %v944, %v946
        %v949 = vsel %vm924, %v948, -inf
        %950 = vmax.xlane.f32.xlu0 %v949
        %v951 = vpop.xlane.xlu0 %950
        %v952 = vsub.f32 %v948, %v951
        %v953 = vmul.f32 %v952, 1.442695
        %v954 = vpow.pop %v953
        %v955 = vsel %vm924, %v954, 0.0
        %956 = vadd.xlane.f32.xlu0 %v955
        %v957 = vpop.xlane.xlu0 %956
        %v958 = vrcp.pop %v957
        %v959 = vmul.f32 %v954, %v958
        %v960 = vpack.c.bf16 %v959, %v959
        %961 = vrot.lane.b32.xlu0 %v921, 64
        %v962 = vpop.permute.xlu0 %961
        %v964 = vsel %vm924, %v960, 0
        %vm966 = vcmask 1043456
        %v968 = vsel %vm966, %v962, 0
        %970 = vmatpush.bf16.msra.mxu0 0
        %971 = vmatpush.bf16.msra.mxu0 0
        %972 = vmatpush.bf16.msra.mxu0 0
        %973 = vmatpush.bf16.msra.mxu0 0
        %974 = vmatpush.bf16.msra.mxu0 0
        %975 = vmatpush.bf16.msra.mxu0 0
        %976 = vmatpush.bf16.msra.mxu0 0
        %977 = vmatpush.bf16.msra.mxu0 %v968
        %978 = vmatmul.bf16.gmra.mxu0 %v964
        %v979 = vpop.f32.mrf.mxu0
        %v980 = vadd.f32 0.0, %v979
        %v981 = vpop.f32.mrf.mxu0
        %982 = vdwg.mxu0
        %983 = vst.msk [vmem:[#allocation3] sm:$0xff] %vm924, %v980
        %984 = vrot.lane.b32.xlu0 %v921, 120
        %v985 = vpop.permute.xlu0 %984
        %986 = vrot.lane.b32.xlu0 %v921, 88
        %v987 = vpop.permute.xlu0 %986
        %v989 = vsel %vm924, %v985, 0
        %v992 = vsel %vm924, %v987, 0
        %994 = vmatpush.bf16.xpose.msra.mxu0 0
        %995 = vmatpush.bf16.xpose.msra.mxu0 0
        %996 = vmatpush.bf16.xpose.msra.mxu0 0
        %997 = vmatpush.bf16.xpose.msra.mxu0 0
        %998 = vmatpush.bf16.xpose.msra.mxu0 0
        %999 = vmatpush.bf16.xpose.msra.mxu0 0
        %1000 = vmatpush.bf16.xpose.msra.mxu0 0
        %1001 = vmatpush.bf16.xpose.msra.mxu0 %v992
        %1002 = vmatmul.bf16.gmra.mxu0 %v989
        %v1003 = vpop.f32.mrf.mxu0
        %v1004 = vadd.f32 0.0, %v1003
        %v1005 = vpop.f32.mrf.mxu0
        %1006 = vdwg.mxu0
        %v1007 = vmul.f32 %v1004, 0.35355338
        %v1008 = vadd.f32 %v1007, %v946
        %v1009 = vsel %vm924, %v1008, -inf
        %1010 = vmax.xlane.f32.xlu0 %v1009
        %v1011 = vpop.xlane.xlu0 %1010
        %v1012 = vsub.f32 %v1008, %v1011
        %v1013 = vmul.f32 %v1012, 1.442695
        %v1014 = vpow.pop %v1013
        %v1015 = vsel %vm924, %v1014, 0.0
        %1016 = vadd.xlane.f32.xlu0 %v1015
        %v1017 = vpop.xlane.xlu0 %1016
        %v1018 = vrcp.pop %v1017
        %v1019 = vmul.f32 %v1014, %v1018
        %v1020 = vpack.c.bf16 %v1019, %v1019
        %1021 = vrot.lane.b32.xlu0 %v921, 56
        %v1022 = vpop.permute.xlu0 %1021
        %v1024 = vsel %vm924, %v1020, 0
        %v1027 = vsel %vm966, %v1022, 0
        %1029 = vmatpush.bf16.msra.mxu0 0
        %1030 = vmatpush.bf16.msra.mxu0 0
        %1031 = vmatpush.bf16.msra.mxu0 0
        %1032 = vmatpush.bf16.msra.mxu0 0
        %1033 = vmatpush.bf16.msra.mxu0 0
        %1034 = vmatpush.bf16.msra.mxu0 0
        %1035 = vmatpush.bf16.msra.mxu0 0
        %1036 = vmatpush.bf16.msra.mxu0 %v1027
        %1037 = vmatmul.bf16.gmra.mxu0 %v1024
        %v1038 = vpop.f32.mrf.mxu0
        %v1039 = vadd.f32 0.0, %v1038
        %v1040 = vpop.f32.mrf.mxu0
        %1041 = vdwg.mxu0
        %1043 = vrot.lane.b32.xlu0 %v1039, 8
        %v1044 = vpop.permute.xlu0 %1043
        %vm1046 = vcmask 130112
        %1047 = vst.msk [vmem:[#allocation3] sm:$0xff] %vm1046, %v1044
        %1048 = vrot.lane.b32.xlu0 %v921, 112
        %v1049 = vpop.permute.xlu0 %1048
        %1050 = vrot.lane.b32.xlu0 %v921, 80
        %v1051 = vpop.permute.xlu0 %1050
        %v1053 = vsel %vm924, %v1049, 0
        %v1056 = vsel %vm924, %v1051, 0
        %1058 = vmatpush.bf16.xpose.msra.mxu0 0
        %1059 = vmatpush.bf16.xpose.msra.mxu0 0
        %1060 = vmatpush.bf16.xpose.msra.mxu0 0
        %1061 = vmatpush.bf16.xpose.msra.mxu0 0
        %1062 = vmatpush.bf16.xpose.msra.mxu0 0
        %1063 = vmatpush.bf16.xpose.msra.mxu0 0
        %1064 = vmatpush.bf16.xpose.msra.mxu0 0
        %1065 = vmatpush.bf16.xpose.msra.mxu0 %v1056
        %1066 = vmatmul.bf16.gmra.mxu0 %v1053
        %v1067 = vpop.f32.mrf.mxu0
        %v1068 = vadd.f32 0.0, %v1067
        %v1069 = vpop.f32.mrf.mxu0
        %1070 = vdwg.mxu0
        %v1071 = vmul.f32 %v1068, 0.35355338
        %v1072 = vadd.f32 %v1071, %v946
        %v1073 = vsel %vm924, %v1072, -inf
        %1074 = vmax.xlane.f32.xlu0 %v1073
        %v1075 = vpop.xlane.xlu0 %1074
        %v1076 = vsub.f32 %v1072, %v1075
        %v1077 = vmul.f32 %v1076, 1.442695
        %v1078 = vpow.pop %v1077
        %v1079 = vsel %vm924, %v1078, 0.0
        %1080 = vadd.xlane.f32.xlu0 %v1079
        %v1081 = vpop.xlane.xlu0 %1080
        %v1082 = vrcp.pop %v1081
        %v1083 = vmul.f32 %v1078, %v1082
        %v1084 = vpack.c.bf16 %v1083, %v1083
        %1085 = vrot.lane.b32.xlu0 %v921, 48
        %v1086 = vpop.permute.xlu0 %1085
        %v1088 = vsel %vm924, %v1084, 0
        %v1091 = vsel %vm966, %v1086, 0
        %1093 = vmatpush.bf16.msra.mxu0 0
        %1094 = vmatpush.bf16.msra.mxu0 0
        %1095 = vmatpush.bf16.msra.mxu0 0
        %1096 = vmatpush.bf16.msra.mxu0 0
        %1097 = vmatpush.bf16.msra.mxu0 0
        %1098 = vmatpush.bf16.msra.mxu0 0
        %1099 = vmatpush.bf16.msra.mxu0 0
        %1100 = vmatpush.bf16.msra.mxu0 %v1091
        %1101 = vmatmul.bf16.gmra.mxu0 %v1088
        %v1102 = vpop.f32.mrf.mxu0
        %v1103 = vadd.f32 0.0, %v1102
        %v1104 = vpop.f32.mrf.mxu0
        %1105 = vdwg.mxu0
        %1107 = vrot.lane.b32.xlu0 %v1103, 16
        %v1108 = vpop.permute.xlu0 %1107
        %vm1110 = vcmask 195712
        %1111 = vst.msk [vmem:[#allocation3] sm:$0xff] %vm1110, %v1108
        %1112 = vrot.lane.b32.xlu0 %v921, 104
        %v1113 = vpop.permute.xlu0 %1112
        %1114 = vrot.lane.b32.xlu0 %v921, 72
        %v1115 = vpop.permute.xlu0 %1114
        %v1117 = vsel %vm924, %v1113, 0
        %v1120 = vsel %vm924, %v1115, 0
        %1122 = vmatpush.bf16.xpose.msra.mxu0 0
        %1123 = vmatpush.bf16.xpose.msra.mxu0 0
        %1124 = vmatpush.bf16.xpose.msra.mxu0 0
        %1125 = vmatpush.bf16.xpose.msra.mxu0 0
        %1126 = vmatpush.bf16.xpose.msra.mxu0 0
        %1127 = vmatpush.bf16.xpose.msra.mxu0 0
        %1128 = vmatpush.bf16.xpose.msra.mxu0 0
        %1129 = vmatpush.bf16.xpose.msra.mxu0 %v1120
        %1130 = vmatmul.bf16.gmra.mxu0 %v1117
        %v1131 = vpop.f32.mrf.mxu0
        %v1132 = vadd.f32 0.0, %v1131
        %v1133 = vpop.f32.mrf.mxu0
        %1134 = vdwg.mxu0
        %v1135 = vmul.f32 %v1132, 0.35355338
        %v1136 = vadd.f32 %v1135, %v946
        %v1137 = vsel %vm924, %v1136, -inf
        %1138 = vmax.xlane.f32.xlu0 %v1137
        %v1139 = vpop.xlane.xlu0 %1138
        %v1140 = vsub.f32 %v1136, %v1139
        %v1141 = vmul.f32 %v1140, 1.442695
        %v1142 = vpow.pop %v1141
        %v1143 = vsel %vm924, %v1142, 0.0
        %1144 = vadd.xlane.f32.xlu0 %v1143
        %v1145 = vpop.xlane.xlu0 %1144
        %v1146 = vrcp.pop %v1145
        %v1147 = vmul.f32 %v1142, %v1146
        %v1148 = vpack.c.bf16 %v1147, %v1147
        %1149 = vrot.lane.b32.xlu0 %v921, 40
        %v1150 = vpop.permute.xlu0 %1149
        %v1152 = vsel %vm924, %v1148, 0
        %v1155 = vsel %vm966, %v1150, 0
        %1157 = vmatpush.bf16.msra.mxu0 0
        %1158 = vmatpush.bf16.msra.mxu0 0
        %1159 = vmatpush.bf16.msra.mxu0 0
        %1160 = vmatpush.bf16.msra.mxu0 0
        %1161 = vmatpush.bf16.msra.mxu0 0
        %1162 = vmatpush.bf16.msra.mxu0 0
        %1163 = vmatpush.bf16.msra.mxu0 0
        %1164 = vmatpush.bf16.msra.mxu0 %v1155
        %1165 = vmatmul.bf16.gmra.mxu0 %v1152
        %v1166 = vpop.f32.mrf.mxu0
        %v1167 = vadd.f32 0.0, %v1166
        %v1168 = vpop.f32.mrf.mxu0
        %1169 = vdwg.mxu0
        %1171 = vrot.lane.b32.xlu0 %v1167, 24
        %v1172 = vpop.permute.xlu0 %1171
        %vm1174 = vcmask 261312
        %1175 = vst.msk [vmem:[#allocation3] sm:$0xff] %vm1174, %v1172
        %v1176 = vld [vmem:[#allocation3] sm:$0xff]
        %v1177 = vpack.c.bf16 %v1176, %v1176
        %v1178 = vld [vmem:[%s805] sm:$0xf]
        %v1179 = vld [vmem:[%s805 + $0x4] sm:$0xf]
        %v1180 = vld [vmem:[%s805 + $0x8] sm:$0xf]
        %v1181 = vld [vmem:[%s805 + $0xc] sm:$0xf]
        %v1182 = vld [vmem:[%s808] sm:$0x1]
        %v1184 = vperm.slane %v1182, 0
        %v1190 = vunpack.c.l.b16 %v1178
        %v1191 = vunpack.c.l.b16 %v1179
        %v1192 = vunpack.c.l.b16 %v1180
        %v1193 = vunpack.c.l.b16 %v1181
        %v1194 = vpack.c.b16 %v1191, %v1190
        %v1195 = vpack.c.b16 %v1193, %v1192
        %v1199 = vsel %vm900, %v1177, 0
        %1201 = vmatpush.bf16.msra.mxu0 0
        %1202 = vmatpush.bf16.msra.mxu0 0
        %1203 = vmatpush.bf16.msra.mxu0 0
        %1204 = vmatpush.bf16.msra.mxu0 0
        %1205 = vmatpush.bf16.msra.mxu0 0
        %1206 = vmatpush.bf16.msra.mxu0 0
        %1207 = vmatpush.bf16.msra.mxu0 %v1195
        %1208 = vmatpush.bf16.msra.mxu0 %v1194
        %1209 = vmatmul.bf16.gmra.mxu0 %v1199
        %v1210 = vpop.f32.mrf.mxu0
        %v1211 = vadd.f32 %v1184, %v1210
        %v1212 = vpop.f32.mrf.mxu0
        %1213 = vdwg.mxu0
        %v1214 = vadd.f32 %v1211, %v878
        %v1215 = vld [vmem:[%s811] sm:$0x1]
        %v1216 = vld [vmem:[%s684] sm:$0x1]
        %v1217 = vsel %vm900, %v1214, 0.0
        %1218 = vadd.xlane.f32.xlu0 %v1217
        %v1219 = vpop.xlane.xlu0 %1218
        %v1220 = vrcp.pop 32.0
        %v1221 = vmul.f32 32.0, %v1220
        %v1222 = vsub.f32 1.0, %v1221
        %v1223 = vmul.f32 %v1220, %v1222
        %v1224 = vadd.f32 %v1220, %v1223
        %vm1225 = vweird.f32 %v1220
        %v1226 = vsel %vm1225, %v1220, %v1224
        %v1227 = vmul.f32 %v1219, %v1226
        %v1228 = vsub.f32 %v1214, %v1227
        %v1229 = vmul.f32 %v1228, %v1228
        %v1230 = vsel %vm900, %v1229, 0.0
        %1231 = vadd.xlane.f32.xlu0 %v1230
        %v1232 = vpop.xlane.xlu0 %1231
        %v1233 = vmul.f32 %v1232, %v1226
        %v1234 = vadd.f32 %v1233, 1e-12
        %v1235 = vrsqrt.pop %v1234
        %v1236 = vmul.f32 %v1235, %v1234
        %v1237 = vmul.f32 %v1236, %v1235
        %v1238 = vmul.f32 0.5, %v1237
        %v1239 = vsub.f32 1.5, %v1238
        %v1240 = vmul.f32 %v1235, %v1239
        %vm1241 = vweird.f32 %v1234
        %vm1242 = vweird.f32 %v1235
        %vm1243 = vmor %vm1241, %vm1242
        %v1244 = vsel %vm1243, %v1235, %v1240
        %v1245 = vmul.f32 %v1228, %v1244
        %v1247 = vperm.slane %v1215, 0
        %v1249 = vmul.f32 %v1245, %v1247
        %v1251 = vperm.slane %v1216, 0
        %v1253 = vadd.f32 %v1249, %v1251
        %v1254 = vpack.c.bf16 %v1253, %v1253
        %v1255 = vld [vmem:[%s816] sm:$0xf]
        %v1256 = vld [vmem:[%s816 + $0x4] sm:$0xf]
        %v1257 = vld [vmem:[%s816 + $0x8] sm:$0xf]
        %v1258 = vld [vmem:[%s816 + $0xc] sm:$0xf]
        %v1259 = vld [vmem:[%s819] sm:$0x1]
        %v1261 = vperm.slane %v1259, 0
        %v1267 = vunpack.c.l.b16 %v1255
        %v1268 = vunpack.c.l.b16 %v1256
        %v1269 = vunpack.c.l.b16 %v1257
        %v1270 = vunpack.c.l.b16 %v1258
        %v1271 = vpack.c.b16 %v1268, %v1267
        %v1272 = vpack.c.b16 %v1270, %v1269
        %v1276 = vsel %vm900, %v1254, 0
        %1278 = vmatpush.bf16.msra.mxu0 0
        %1279 = vmatpush.bf16.msra.mxu0 0
        %1280 = vmatpush.bf16.msra.mxu0 0
        %1281 = vmatpush.bf16.msra.mxu0 0
        %1282 = vmatpush.bf16.msra.mxu0 0
        %1283 = vmatpush.bf16.msra.mxu0 0
        %1284 = vmatpush.bf16.msra.mxu0 %v1272
        %1285 = vmatpush.bf16.msra.mxu0 %v1271
        %1286 = vmatmul.bf16.gmra.mxu0 %v1276
        %v1287 = vpop.f32.mrf.mxu0
        %v1288 = vadd.f32 %v1261, %v1287
        %v1289 = vpop.f32.mrf.mxu0
        %1290 = vdwg.mxu0
        %v1291 = vmul.f32 %v1288, 0.5
        %v1292 = vmul.f32 %v1288, 0.044715
        %v1293 = vmul.f32 %v1292, %v1288
        %v1294 = vmul.f32 %v1293, %v1288
        %v1295 = vadd.f32 %v1288, %v1294
        %v1296 = vmul.f32 %v1295, 0.7978846
        %v1297 = vtanh.pop %v1296
        %v1298 = vadd.f32 %v1297, 1.0
        %v1299 = vmul.f32 %v1291, %v1298
        %v1300 = vpack.c.bf16 %v1299, %v1299
        %v1301 = vld [vmem:[%s824] sm:$0xf]
        %v1302 = vld [vmem:[%s824 + $0x4] sm:$0xf]
        %v1303 = vld [vmem:[%s824 + $0x8] sm:$0xf]
        %v1304 = vld [vmem:[%s824 + $0xc] sm:$0xf]
        %v1305 = vld [vmem:[%s824 + $0x10] sm:$0xf]
        %v1306 = vld [vmem:[%s824 + $0x14] sm:$0xf]
        %v1307 = vld [vmem:[%s824 + $0x18] sm:$0xf]
        %v1308 = vld [vmem:[%s824 + $0x1c] sm:$0xf]
        %v1309 = vld [vmem:[%s827] sm:$0x1]
        %v1311 = vperm.slane %v1309, 0
        %v1321 = vunpack.c.l.b16 %v1301
        %v1322 = vunpack.c.l.b16 %v1302
        %v1323 = vunpack.c.l.b16 %v1303
        %v1324 = vunpack.c.l.b16 %v1304
        %v1325 = vunpack.c.l.b16 %v1305
        %v1326 = vunpack.c.l.b16 %v1306
        %v1327 = vunpack.c.l.b16 %v1307
        %v1328 = vunpack.c.l.b16 %v1308
        %v1329 = vpack.c.b16 %v1322, %v1321
        %v1330 = vpack.c.b16 %v1324, %v1323
        %v1331 = vpack.c.b16 %v1326, %v1325
        %v1332 = vpack.c.b16 %v1328, %v1327
        %vm1337 = vcmask 523264
        %v1339 = vsel %vm1337, %v1300, 0
        %1341 = vmatpush.bf16.msra.mxu0 0
        %1342 = vmatpush.bf16.msra.mxu0 0
        %1343 = vmatpush.bf16.msra.mxu0 0
        %1344 = vmatpush.bf16.msra.mxu0 0
        %1345 = vmatpush.bf16.msra.mxu0 %v1332
        %1346 = vmatpush.bf16.msra.mxu0 %v1331
        %1347 = vmatpush.bf16.msra.mxu0 %v1330
        %1348 = vmatpush.bf16.msra.mxu0 %v1329
        %1349 = vmatmul.bf16.gmra.mxu0 %v1339
        %v1350 = vpop.f32.mrf.mxu0
        %v1351 = vadd.f32 %v1311, %v1350
        %v1352 = vpop.f32.mrf.mxu0
        %1353 = vdwg.mxu0
        %v1354 = vadd.f32 %v1351, %v1253
        %v1355 = vld [vmem:[%s830] sm:$0x1]
        %v1356 = vld [vmem:[%s693] sm:$0x1]
        %v1357 = vsel %vm900, %v1354, 0.0
        %1358 = vadd.xlane.f32.xlu0 %v1357
        %v1359 = vpop.xlane.xlu0 %1358
        %v1360 = vmul.f32 %v1359, %v1226
        %v1361 = vsub.f32 %v1354, %v1360
        %v1362 = vmul.f32 %v1361, %v1361
        %v1363 = vsel %vm900, %v1362, 0.0
        %1364 = vadd.xlane.f32.xlu0 %v1363
        %v1365 = vpop.xlane.xlu0 %1364
        %v1366 = vmul.f32 %v1365, %v1226
        %v1367 = vadd.f32 %v1366, 1e-12
        %v1368 = vrsqrt.pop %v1367
        %v1369 = vmul.f32 %v1368, %v1367
        %v1370 = vmul.f32 %v1369, %v1368
        %v1371 = vmul.f32 0.5, %v1370
        %v1372 = vsub.f32 1.5, %v1371
        %v1373 = vmul.f32 %v1368, %v1372
        %vm1374 = vweird.f32 %v1367
        %vm1375 = vweird.f32 %v1368
        %vm1376 = vmor %vm1374, %vm1375
        %v1377 = vsel %vm1376, %v1368, %v1373
        %v1378 = vmul.f32 %v1361, %v1377
        %v1380 = vperm.slane %v1355, 0
        %v1382 = vmul.f32 %v1378, %v1380
        %v1384 = vperm.slane %v1356, 0
        %v1386 = vadd.f32 %v1382, %v1384
        %1387 = vst.msk [vmem:[#allocation2] sm:$0xff] %vm900, %v1386
        %p1388 = scmp.eq.s32.totalorder %s44, 1
        // Predicated region
        $region109: #{tpu_custom_call.1} parent=83 // pred_check
          %p1389 = pneg %p1388
        $region110: #{tpu_custom_call.1} parent=83 // pred_check_branch
          %1391 = sbr.rel (%p1389) target = $region112
        $region111: #{tpu_custom_call.1} parent=83 // pred_region
          %1392 = vst.msk [vmem:[%s792] sm:$0xff] %vm900, %v1386
        $region112: #{tpu_custom_call.1} parent=83 // pred_fallthru
          _
        %s1393 = sand.u32 %s465, 1
        %s1394 = scalar_lea.sflag [#allocation6], %s1393
        %s1395 = sand.u32 %s465, 1
        %s1396 = smul.addr %s1395, 8
        %s1397 = scalar_lea.vmem [#allocation13], %s1396
        // Predicated region
        $region113: #{tpu_custom_call.1} parent=83 // pred_check
          %p1398 = pneg %p475
        $region114: #{tpu_custom_call.1} parent=83 // pred_check_branch
          %1400 = sbr.rel (%p1398) target = $region116
        $region115: #{tpu_custom_call.1} parent=83 // pred_region
          %1402 = vsyncadd %s1394, 0
          %s1403 = smul.addr %s43, 8
          %s1404 = scalar_lea.hbm %s16, %s1403
          %s1406 = sshll.u32 %s1397, 4
          %s1407 = int_to_ptr.vmem [resolvable:$true] %s1406
          %s1408 = sshll.u32 %s1404, 4
          %s1409 = int_to_ptr.hbm [resolvable:$true] %s1408
          %1411 = dma.vmem_to_hbm [thread:$0]  %s1407, 128, %s1409, %s1394
        $region116: #{tpu_custom_call.1} parent=83 // pred_fallthru
          _
      $region84: #{tpu_custom_call.1} parent=5 // pred_fallthru
        _
      %p1412 = scmp.le.s32.totalorder 2, %s34
      // Predicated region
      $region117: #{tpu_custom_call.1} parent=5 // pred_check
        %p1413 = pneg %p1412
      $region118: #{tpu_custom_call.1} parent=5 // pred_check_branch
        %1415 = sbr.rel (%p1413) target = $region120
      $region119: #{tpu_custom_call.1} parent=5 // pred_region
        %s1416 = ssub.s32 %s34, 2
        // Predicated region
        $region121: #{tpu_custom_call.1} parent=119 // pred_check
          %p1417 = pneg %p481
        $region122: #{tpu_custom_call.1} parent=119 // pred_check_branch
          %1419 = sbr.rel (%p1417) target = $region124
        $region123: #{tpu_custom_call.1} parent=119 // pred_region
          %s1420 = sand.u32 %s466, 1
          %s1421 = scalar_lea.sflag [#allocation6], %s1420
          %s1422 = sand.u32 %s466, 1
          %s1423 = smul.addr %s1422, 8
          %s1424 = scalar_lea.vmem [#allocation13], %s1423
          %1426 = dma.done %s1421, 128
        $region124: #{tpu_custom_call.1} parent=119 // pred_fallthru
          _
      $region120: #{tpu_custom_call.1} parent=5 // pred_fallthru
        _
    $region6: #{tpu_custom_call.1} parent=1 // loop_footer
      %s38 = sadd.s32 1, %s34
    $region7: #{tpu_custom_call.1} parent=1 // loop_footer_branch
      %33 = sbr.rel target = $region3
    $region8: #{tpu_custom_call.1} parent=1 // loop_exit
      _
    %1427 = vsyncpa [#allocation5], 1
    %s1428 = scalar_lea.sflag [#allocation5], 1
    %1429 = vsyncpa %s1428, 1
    %1430 = vsyncpa [#allocation8], 1
    %s1431 = scalar_lea.sflag [#allocation8], 1
    %1432 = vsyncpa %s1431, 1
    %1433 = vsyncpa [#allocation11], 1
    %s1434 = scalar_lea.sflag [#allocation11], 1
    %1435 = vsyncpa %s1434, 1
    %1436 = vsyncpa [#allocation6], 1
    %s1437 = scalar_lea.sflag [#allocation6], 1
    %1438 = vsyncpa %s1437, 1

</llo_original>
